<compile_context>
chip_gen: v7x
topology: tpu7x:2x2x1
jax: 0.10.0
libtpu: 0.0.40
codegen_flags: <defaults>
</compile_context>

<pallas_src>
import jax
import jax.numpy as jnp
from jax.experimental import pallas as pl
from jax.experimental.pallas import tpu as pltpu

HIDDEN = 20
IN_DIM = 3
OUT_DIM = 1
N_LAYERS = 9
H_PAD = 24          # hidden feature dims zero-padded to 24 (multiple of 8 sublanes)
IN_PAD = 8          # input feature dim (3) zero-padded to 8 sublanes only
OUT_ROWS = 8        # output slab rows (row 0 carries u, rows 1..7 are zero)
TM_MAX = 4096       # max batch tile (lanes per grid step)


def _softplus(x):
    # Numerically stable softplus: max(x,0) + log1p(exp(-|x|)).
    # Matches torch.nn.Softplus(beta=1, threshold=20) to <1e-9.
    return jnp.maximum(x, 0.0) + jnp.log1p(jnp.exp(-jnp.abs(x)))


_ACTS = (jnp.tanh, jnp.tanh, _softplus, jnp.sin, _softplus, jnp.sin,
         _softplus, jnp.sin, None)


def dnn_kernel(x_ref, w1_ref, w_ref, b_ref, o_ref):
    # x_ref:  [IN_PAD, TM]               rows 0..2 = (x1, x2, t), rows 3..7 zero
    # w1_ref: [H_PAD, IN_PAD]            layer-1 weight, PyTorch [out, in], zero-padded
    # w_ref:  [N_LAYERS-1, H_PAD, H_PAD] layers 2..9 weights, zero-padded
    # b_ref:  [N_LAYERS, H_PAD, 1]       biases, zero-padded
    # o_ref:  [OUT_ROWS, TM]             row 0 = u(x)
    h = jnp.tanh(jnp.dot(w1_ref[...], x_ref[...],
                         preferred_element_type=jnp.float32) + b_ref[0])
    for l in range(1, N_LAYERS):  # static unroll over the remaining 8 layers
        z = jnp.dot(w_ref[l - 1], h, preferred_element_type=jnp.float32) + b_ref[l]
        act = _ACTS[l]
        h = act(z) if act is not None else z
    # Padded weight rows/cols are zero, so garbage in padded sublane rows
    # (e.g. softplus(0)=ln2) never leaks into real rows; output row 0 is u,
    # rows 1..7 are exactly zero (last layer has no activation, zero bias pad).
    o_ref[...] = h[:OUT_ROWS, :]


def init_dnn_params(key, hidden=HIDDEN):
    """PyTorch-native params: (w [out, in], b [out]) with nn.Linear default init."""
    dims = [(IN_DIM, hidden)] + [(hidden, hidden)] * 7 + [(hidden, OUT_DIM)]
    params = []
    for fi, fo in dims:
        key, k_w, k_b = jax.random.split(key, 3)
        bound = 1.0 / float(fi) ** 0.5
        w = jax.random.uniform(k_w, (fo, fi), jnp.float32, -bound, bound)
        b = jax.random.uniform(k_b, (fo,), jnp.float32, -bound, bound)
        params.append((w, b))
    return params


def pack_params(params):
    """Pack 9 (w, b) pairs into zero-padded arrays (one DMA each).

    Returns (W1 [H_PAD, IN_PAD], W [N_LAYERS-1, H_PAD, H_PAD], B [N_LAYERS, H_PAD, 1]).
    """
    w1, b1 = params[0]
    W1 = jnp.zeros((H_PAD, IN_PAD), jnp.float32).at[:w1.shape[0], :w1.shape[1]].set(
        w1.astype(jnp.float32))
    W = jnp.zeros((N_LAYERS - 1, H_PAD, H_PAD), jnp.float32)
    B = jnp.zeros((N_LAYERS, H_PAD, 1), jnp.float32)
    B = B.at[0, :b1.shape[0], 0].set(b1.astype(jnp.float32))
    for l in range(1, N_LAYERS):
        w, b = params[l]
        out_d, in_d = w.shape
        W = W.at[l - 1, :out_d, :in_d].set(w.astype(jnp.float32))
        B = B.at[l, :out_d, 0].set(b.astype(jnp.float32))
    return W1, W, B


def _pick_tiling(n):
    """Balanced, 128-aligned batch tiles; >=2 grid steps when possible (v7x 2 TCs)."""
    n128 = pl.cdiv(n, 128) * 128
    min_tiles = 2 if n128 >= 256 else 1
    nt = max(pl.cdiv(n128, TM_MAX), min_tiles)
    tm = pl.cdiv(pl.cdiv(n128, nt), 128) * 128
    grid = pl.cdiv(n128, tm)
    return tm, grid, grid * tm


@jax.jit
def wan_pde_solver_forward(x, packed_w1, packed_w, packed_b):
    """Forward pass of wan_pde_solver: u = u_net(x), x: [N, 3] -> u: [N, 1]."""
    assert x.shape[-1] == IN_DIM
    n = x.shape[0]
    tm, grid, n_pad = _pick_tiling(n)

    # Transposed, lane-dense input: [IN_PAD, n_pad], batch on the lane axis.
    xt = (jnp.zeros((IN_PAD, n_pad), jnp.float32)
          .at[:IN_DIM, :n].set(x.astype(jnp.float32).T))

    # Advisory cost hint: ~11 transcendentals per hidden unit per point
    # (2 tanh + 3 softplus(exp+log1p) + 3 sin).
    cost = pl.CostEstimate(
        flops=2 * (H_PAD * IN_PAD + (N_LAYERS - 1) * H_PAD * H_PAD) * n_pad,
        transcendentals=11 * HIDDEN * n_pad,
        bytes_accessed=4 * (IN_PAD * n_pad + OUT_ROWS * n_pad
                            + packed_w1.size + packed_w.size + packed_b.size))

    out = pl.pallas_call(
        dnn_kernel,
        out_shape=jax.ShapeDtypeStruct((OUT_ROWS, n_pad), jnp.float32),
        grid=(grid,),
        in_specs=[
            pl.BlockSpec((IN_PAD, tm), lambda i: (0, i)),
            pl.BlockSpec(packed_w1.shape, lambda i: (0, 0)),
            pl.BlockSpec(packed_w.shape, lambda i: (0, 0, 0)),
            pl.BlockSpec(packed_b.shape, lambda i: (0, 0, 0)),
        ],
        out_specs=pl.BlockSpec((OUT_ROWS, tm), lambda i: (0, i)),
        compiler_params=pltpu.CompilerParams(
            dimension_semantics=("parallel",)),
        cost_estimate=cost,
    )(xt, packed_w1, packed_w, packed_b)

    return out[0, :n].reshape(n, 1)


def _reference_forward(x, params):
    """Pure-JAX reference (standard [N, F] layout) for correctness checking."""
    h = x.astype(jnp.float32)
    acts = [jnp.tanh, jnp.tanh, jax.nn.softplus, jnp.sin, jax.nn.softplus,
            jnp.sin, jax.nn.softplus, jnp.sin, lambda v: v]
    for (w, b), act in zip(params, acts):
        h = act(h @ w.T + b)
    return h


if __name__ == "__main__":
    key = jax.random.PRNGKey(0)
    k_param, k_x, k_t = jax.random.split(key, 3)

    params = init_dnn_params(k_param)
    packed_w1, packed_w, packed_b = pack_params(params)

    # Collocation points (x1, x2, t): x in [-1, 1]^2, t in [0, 1]; N = 256 points.
    N = 256
    x_sp = jax.random.uniform(k_x, (N, 2), jnp.float32, -1.0, 1.0)
    t = jax.random.uniform(k_t, (N, 1), jnp.float32, 0.0, 1.0)
    x = jnp.concatenate([x_sp, t], axis=1)  # [N, 3]

    u = wan_pde_solver_forward(x, packed_w1, packed_w, packed_b)
    u = jax.block_until_ready(u)

    u_ref = _reference_forward(x, params)
    assert u.shape == (N, OUT_DIM)
    assert jnp.allclose(u, u_ref, atol=1e-5, rtol=1e-5), "mismatch vs reference"

    print("KERNEL_OK")
</pallas_src>

<mosaic_0001>
module attributes {stable_mosaic.version = 11 : i64} {
  func.func @dnn_kernel(%arg0: i32, %arg1: memref<8x128xf32, #tpu.memory_space<vmem>>, %arg2: memref<24x8xf32, #tpu.memory_space<vmem>>, %arg3: memref<8x24x24xf32, #tpu.memory_space<vmem>>, %arg4: memref<9x24x1xf32, #tpu.memory_space<vmem>>, %arg5: memref<8x128xf32, #tpu.memory_space<vmem>>) attributes {dimension_semantics = [#tpu.dimension_semantics<parallel>], iteration_bounds = array<i64: 2>, scalar_prefetch = 0 : i64, scratch_operands = 0 : i64, tpu.core_type = #tpu.core_type<tc>, window_params = [{transform_indices = @transform_0, window_bounds = array<i64: 8, 128>}, {pipeline_mode = #tpu.pipeline_mode<synchronous>, transform_indices = @transform_1, window_bounds = array<i64: 24, 8>}, {pipeline_mode = #tpu.pipeline_mode<synchronous>, transform_indices = @transform_2, window_bounds = array<i64: 8, 24, 24>}, {pipeline_mode = #tpu.pipeline_mode<synchronous>, transform_indices = @transform_3, window_bounds = array<i64: 9, 24, 1>}, {transform_indices = @transform_4, window_bounds = array<i64: 8, 128>}]} {
    %c0 = arith.constant 0 : index
    %c0_0 = arith.constant 0 : index
    %0 = vector.load %arg2[%c0, %c0_0] : memref<24x8xf32, #tpu.memory_space<vmem>>, vector<24x8xf32>
    %c0_1 = arith.constant 0 : index
    %c0_2 = arith.constant 0 : index
    %1 = vector.load %arg1[%c0_1, %c0_2] : memref<8x128xf32, #tpu.memory_space<vmem>>, vector<8x128xf32>
    %cst = arith.constant dense<0.000000e+00> : vector<24x128xf32>
    %2 = tpu.matmul %0, %1, %cst {dimension_numbers = #tpu.dot_dimension_numbers<[1], [0], [0], [1], [0, 0, 1, 1], [], []>} : vector<24x8xf32>, vector<8x128xf32>, vector<24x128xf32> -> vector<24x128xf32>
    %c0_3 = arith.constant 0 : index
    %c0_4 = arith.constant 0 : index
    %c0_5 = arith.constant 0 : index
    %3 = vector.load %arg4[%c0_3, %c0_4, %c0_5] : memref<9x24x1xf32, #tpu.memory_space<vmem>>, vector<1x24x1xf32>
    %4 = vector.shape_cast %3 : vector<1x24x1xf32> to vector<24x1xf32>
    %5 = vector.broadcast %4 : vector<24x1xf32> to vector<24x128xf32>
    %6 = arith.addf %2, %5 : vector<24x128xf32>
    %7 = math.tanh %6 : vector<24x128xf32>
    %c0_6 = arith.constant 0 : index
    %c0_7 = arith.constant 0 : index
    %c0_8 = arith.constant 0 : index
    %8 = vector.load %arg3[%c0_6, %c0_7, %c0_8] : memref<8x24x24xf32, #tpu.memory_space<vmem>>, vector<1x24x24xf32>
    %9 = vector.shape_cast %8 : vector<1x24x24xf32> to vector<24x24xf32>
    %cst_9 = arith.constant dense<0.000000e+00> : vector<24x128xf32>
    %10 = tpu.matmul %9, %7, %cst_9 {dimension_numbers = #tpu.dot_dimension_numbers<[1], [0], [0], [1], [0, 0, 1, 1], [], []>} : vector<24x24xf32>, vector<24x128xf32>, vector<24x128xf32> -> vector<24x128xf32>
    %c1 = arith.constant 1 : index
    %c0_10 = arith.constant 0 : index
    %c0_11 = arith.constant 0 : index
    %11 = vector.load %arg4[%c1, %c0_10, %c0_11] : memref<9x24x1xf32, #tpu.memory_space<vmem>>, vector<1x24x1xf32>
    %12 = vector.shape_cast %11 : vector<1x24x1xf32> to vector<24x1xf32>
    %13 = vector.broadcast %12 : vector<24x1xf32> to vector<24x128xf32>
    %14 = arith.addf %10, %13 : vector<24x128xf32>
    %15 = math.tanh %14 : vector<24x128xf32>
    %c1_12 = arith.constant 1 : index
    %c0_13 = arith.constant 0 : index
    %c0_14 = arith.constant 0 : index
    %16 = vector.load %arg3[%c1_12, %c0_13, %c0_14] : memref<8x24x24xf32, #tpu.memory_space<vmem>>, vector<1x24x24xf32>
    %17 = vector.shape_cast %16 : vector<1x24x24xf32> to vector<24x24xf32>
    %cst_15 = arith.constant dense<0.000000e+00> : vector<24x128xf32>
    %18 = tpu.matmul %17, %15, %cst_15 {dimension_numbers = #tpu.dot_dimension_numbers<[1], [0], [0], [1], [0, 0, 1, 1], [], []>} : vector<24x24xf32>, vector<24x128xf32>, vector<24x128xf32> -> vector<24x128xf32>
    %c2 = arith.constant 2 : index
    %c0_16 = arith.constant 0 : index
    %c0_17 = arith.constant 0 : index
    %19 = vector.load %arg4[%c2, %c0_16, %c0_17] : memref<9x24x1xf32, #tpu.memory_space<vmem>>, vector<1x24x1xf32>
    %20 = vector.shape_cast %19 : vector<1x24x1xf32> to vector<24x1xf32>
    %21 = vector.broadcast %20 : vector<24x1xf32> to vector<24x128xf32>
    %22 = arith.addf %18, %21 : vector<24x128xf32>
    %cst_18 = arith.constant 0.000000e+00 : f32
    %23 = vector.broadcast %cst_18 : f32 to vector<24x128xf32>
    %24 = arith.maximumf %22, %23 : vector<24x128xf32>
    %25 = math.absf %22 : vector<24x128xf32>
    %cst_19 = arith.constant 0.000000e+00 : f32
    %26 = vector.broadcast %cst_19 : f32 to vector<24x128xf32>
    %27 = arith.subf %26, %25 : vector<24x128xf32>
    %28 = math.exp %27 : vector<24x128xf32>
    %29 = math.log1p %28 : vector<24x128xf32>
    %30 = arith.addf %24, %29 : vector<24x128xf32>
    %c2_20 = arith.constant 2 : index
    %c0_21 = arith.constant 0 : index
    %c0_22 = arith.constant 0 : index
    %31 = vector.load %arg3[%c2_20, %c0_21, %c0_22] : memref<8x24x24xf32, #tpu.memory_space<vmem>>, vector<1x24x24xf32>
    %32 = vector.shape_cast %31 : vector<1x24x24xf32> to vector<24x24xf32>
    %cst_23 = arith.constant dense<0.000000e+00> : vector<24x128xf32>
    %33 = tpu.matmul %32, %30, %cst_23 {dimension_numbers = #tpu.dot_dimension_numbers<[1], [0], [0], [1], [0, 0, 1, 1], [], []>} : vector<24x24xf32>, vector<24x128xf32>, vector<24x128xf32> -> vector<24x128xf32>
    %c3 = arith.constant 3 : index
    %c0_24 = arith.constant 0 : index
    %c0_25 = arith.constant 0 : index
    %34 = vector.load %arg4[%c3, %c0_24, %c0_25] : memref<9x24x1xf32, #tpu.memory_space<vmem>>, vector<1x24x1xf32>
    %35 = vector.shape_cast %34 : vector<1x24x1xf32> to vector<24x1xf32>
    %36 = vector.broadcast %35 : vector<24x1xf32> to vector<24x128xf32>
    %37 = arith.addf %33, %36 : vector<24x128xf32>
    %38 = math.sin %37 : vector<24x128xf32>
    %c3_26 = arith.constant 3 : index
    %c0_27 = arith.constant 0 : index
    %c0_28 = arith.constant 0 : index
    %39 = vector.load %arg3[%c3_26, %c0_27, %c0_28] : memref<8x24x24xf32, #tpu.memory_space<vmem>>, vector<1x24x24xf32>
    %40 = vector.shape_cast %39 : vector<1x24x24xf32> to vector<24x24xf32>
    %cst_29 = arith.constant dense<0.000000e+00> : vector<24x128xf32>
    %41 = tpu.matmul %40, %38, %cst_29 {dimension_numbers = #tpu.dot_dimension_numbers<[1], [0], [0], [1], [0, 0, 1, 1], [], []>} : vector<24x24xf32>, vector<24x128xf32>, vector<24x128xf32> -> vector<24x128xf32>
    %c4 = arith.constant 4 : index
    %c0_30 = arith.constant 0 : index
    %c0_31 = arith.constant 0 : index
    %42 = vector.load %arg4[%c4, %c0_30, %c0_31] : memref<9x24x1xf32, #tpu.memory_space<vmem>>, vector<1x24x1xf32>
    %43 = vector.shape_cast %42 : vector<1x24x1xf32> to vector<24x1xf32>
    %44 = vector.broadcast %43 : vector<24x1xf32> to vector<24x128xf32>
    %45 = arith.addf %41, %44 : vector<24x128xf32>
    %cst_32 = arith.constant 0.000000e+00 : f32
    %46 = vector.broadcast %cst_32 : f32 to vector<24x128xf32>
    %47 = arith.maximumf %45, %46 : vector<24x128xf32>
    %48 = math.absf %45 : vector<24x128xf32>
    %cst_33 = arith.constant 0.000000e+00 : f32
    %49 = vector.broadcast %cst_33 : f32 to vector<24x128xf32>
    %50 = arith.subf %49, %48 : vector<24x128xf32>
    %51 = math.exp %50 : vector<24x128xf32>
    %52 = math.log1p %51 : vector<24x128xf32>
    %53 = arith.addf %47, %52 : vector<24x128xf32>
    %c4_34 = arith.constant 4 : index
    %c0_35 = arith.constant 0 : index
    %c0_36 = arith.constant 0 : index
    %54 = vector.load %arg3[%c4_34, %c0_35, %c0_36] : memref<8x24x24xf32, #tpu.memory_space<vmem>>, vector<1x24x24xf32>
    %55 = vector.shape_cast %54 : vector<1x24x24xf32> to vector<24x24xf32>
    %cst_37 = arith.constant dense<0.000000e+00> : vector<24x128xf32>
    %56 = tpu.matmul %55, %53, %cst_37 {dimension_numbers = #tpu.dot_dimension_numbers<[1], [0], [0], [1], [0, 0, 1, 1], [], []>} : vector<24x24xf32>, vector<24x128xf32>, vector<24x128xf32> -> vector<24x128xf32>
    %c5 = arith.constant 5 : index
    %c0_38 = arith.constant 0 : index
    %c0_39 = arith.constant 0 : index
    %57 = vector.load %arg4[%c5, %c0_38, %c0_39] : memref<9x24x1xf32, #tpu.memory_space<vmem>>, vector<1x24x1xf32>
    %58 = vector.shape_cast %57 : vector<1x24x1xf32> to vector<24x1xf32>
    %59 = vector.broadcast %58 : vector<24x1xf32> to vector<24x128xf32>
    %60 = arith.addf %56, %59 : vector<24x128xf32>
    %61 = math.sin %60 : vector<24x128xf32>
    %c5_40 = arith.constant 5 : index
    %c0_41 = arith.constant 0 : index
    %c0_42 = arith.constant 0 : index
    %62 = vector.load %arg3[%c5_40, %c0_41, %c0_42] : memref<8x24x24xf32, #tpu.memory_space<vmem>>, vector<1x24x24xf32>
    %63 = vector.shape_cast %62 : vector<1x24x24xf32> to vector<24x24xf32>
    %cst_43 = arith.constant dense<0.000000e+00> : vector<24x128xf32>
    %64 = tpu.matmul %63, %61, %cst_43 {dimension_numbers = #tpu.dot_dimension_numbers<[1], [0], [0], [1], [0, 0, 1, 1], [], []>} : vector<24x24xf32>, vector<24x128xf32>, vector<24x128xf32> -> vector<24x128xf32>
    %c6 = arith.constant 6 : index
    %c0_44 = arith.constant 0 : index
    %c0_45 = arith.constant 0 : index
    %65 = vector.load %arg4[%c6, %c0_44, %c0_45] : memref<9x24x1xf32, #tpu.memory_space<vmem>>, vector<1x24x1xf32>
    %66 = vector.shape_cast %65 : vector<1x24x1xf32> to vector<24x1xf32>
    %67 = vector.broadcast %66 : vector<24x1xf32> to vector<24x128xf32>
    %68 = arith.addf %64, %67 : vector<24x128xf32>
    %cst_46 = arith.constant 0.000000e+00 : f32
    %69 = vector.broadcast %cst_46 : f32 to vector<24x128xf32>
    %70 = arith.maximumf %68, %69 : vector<24x128xf32>
    %71 = math.absf %68 : vector<24x128xf32>
    %cst_47 = arith.constant 0.000000e+00 : f32
    %72 = vector.broadcast %cst_47 : f32 to vector<24x128xf32>
    %73 = arith.subf %72, %71 : vector<24x128xf32>
    %74 = math.exp %73 : vector<24x128xf32>
    %75 = math.log1p %74 : vector<24x128xf32>
    %76 = arith.addf %70, %75 : vector<24x128xf32>
    %c6_48 = arith.constant 6 : index
    %c0_49 = arith.constant 0 : index
    %c0_50 = arith.constant 0 : index
    %77 = vector.load %arg3[%c6_48, %c0_49, %c0_50] : memref<8x24x24xf32, #tpu.memory_space<vmem>>, vector<1x24x24xf32>
    %78 = vector.shape_cast %77 : vector<1x24x24xf32> to vector<24x24xf32>
    %cst_51 = arith.constant dense<0.000000e+00> : vector<24x128xf32>
    %79 = tpu.matmul %78, %76, %cst_51 {dimension_numbers = #tpu.dot_dimension_numbers<[1], [0], [0], [1], [0, 0, 1, 1], [], []>} : vector<24x24xf32>, vector<24x128xf32>, vector<24x128xf32> -> vector<24x128xf32>
    %c7 = arith.constant 7 : index
    %c0_52 = arith.constant 0 : index
    %c0_53 = arith.constant 0 : index
    %80 = vector.load %arg4[%c7, %c0_52, %c0_53] : memref<9x24x1xf32, #tpu.memory_space<vmem>>, vector<1x24x1xf32>
    %81 = vector.shape_cast %80 : vector<1x24x1xf32> to vector<24x1xf32>
    %82 = vector.broadcast %81 : vector<24x1xf32> to vector<24x128xf32>
    %83 = arith.addf %79, %82 : vector<24x128xf32>
    %84 = math.sin %83 : vector<24x128xf32>
    %c7_54 = arith.constant 7 : index
    %c0_55 = arith.constant 0 : index
    %c0_56 = arith.constant 0 : index
    %85 = vector.load %arg3[%c7_54, %c0_55, %c0_56] : memref<8x24x24xf32, #tpu.memory_space<vmem>>, vector<1x24x24xf32>
    %86 = vector.shape_cast %85 : vector<1x24x24xf32> to vector<24x24xf32>
    %cst_57 = arith.constant dense<0.000000e+00> : vector<24x128xf32>
    %87 = tpu.matmul %86, %84, %cst_57 {dimension_numbers = #tpu.dot_dimension_numbers<[1], [0], [0], [1], [0, 0, 1, 1], [], []>} : vector<24x24xf32>, vector<24x128xf32>, vector<24x128xf32> -> vector<24x128xf32>
    %c8 = arith.constant 8 : index
    %c0_58 = arith.constant 0 : index
    %c0_59 = arith.constant 0 : index
    %88 = vector.load %arg4[%c8, %c0_58, %c0_59] : memref<9x24x1xf32, #tpu.memory_space<vmem>>, vector<1x24x1xf32>
    %89 = vector.shape_cast %88 : vector<1x24x1xf32> to vector<24x1xf32>
    %90 = vector.broadcast %89 : vector<24x1xf32> to vector<24x128xf32>
    %91 = arith.addf %87, %90 : vector<24x128xf32>
    %92 = vector.extract_strided_slice %91 {offsets = [0, 0], sizes = [8, 128], strides = [1, 1]} : vector<24x128xf32> to vector<8x128xf32>
    %c0_60 = arith.constant 0 : index
    %c0_61 = arith.constant 0 : index
    %93 = vector.load %arg5[%c0_60, %c0_61] : memref<8x128xf32, #tpu.memory_space<vmem>>, vector<8x128xf32>
    tpu.vector_store %arg5[%c0_60, %c0_61], %92 {strides = array<i32>} : memref<8x128xf32, #tpu.memory_space<vmem>>, vector<8x128xf32>,
    return
  }
  func.func @transform_0(%arg0: i32) -> (i32, i32) {
    %c0_i32 = arith.constant 0 : i32
    %c0_i32_0 = arith.constant 0 : i32
    return %c0_i32, %arg0 : i32, i32
  }
  func.func @transform_1(%arg0: i32) -> (i32, i32) {
    %c0_i32 = arith.constant 0 : i32
    %c0_i32_0 = arith.constant 0 : i32
    %c0_i32_1 = arith.constant 0 : i32
    return %c0_i32, %c0_i32_0 : i32, i32
  }
  func.func @transform_2(%arg0: i32) -> (i32, i32, i32) {
    %c0_i32 = arith.constant 0 : i32
    %c0_i32_0 = arith.constant 0 : i32
    %c0_i32_1 = arith.constant 0 : i32
    %c0_i32_2 = arith.constant 0 : i32
    return %c0_i32, %c0_i32_0, %c0_i32_1 : i32, i32, i32
  }
  func.func @transform_3(%arg0: i32) -> (i32, i32, i32) {
    %c0_i32 = arith.constant 0 : i32
    %c0_i32_0 = arith.constant 0 : i32
    %c0_i32_1 = arith.constant 0 : i32
    %c0_i32_2 = arith.constant 0 : i32
    return %c0_i32, %c0_i32_0, %c0_i32_1 : i32, i32, i32
  }
  func.func @transform_4(%arg0: i32) -> (i32, i32) {
    %c0_i32 = arith.constant 0 : i32
    %c0_i32_0 = arith.constant 0 : i32
    return %c0_i32, %arg0 : i32, i32
  }
}

</mosaic_0001>

<llo_original>
// kernel: wan_pde_solver_forward.1
$region0: #{wan_pde_solver_forward.1}
  #allocation0 [shape = 'u32[]', space=smem, size = 0x4, offset = 0x4, fixed_abs, tag = 'smem constant byte address 0x4 - core index']
  #allocation1 [shape = 'u32[144,128]{1,0:T(1,128)}', space=vmem, size = 0x12000, scoped, tag = 'internal scratch']
  %s0 = inlined_call_operand.vmem [shape: f32[8,256], index: 0, kind: input, shape index: {}]
  %s1 = inlined_call_operand.vmem [shape: f32[24,8], index: 1, kind: input, shape index: {}]
  %s2 = inlined_call_operand.vmem [shape: f32[8,24,24], index: 2, kind: input, shape index: {}]
  %s3 = inlined_call_operand.vmem [shape: f32[9,24,1], index: 3, kind: input, shape index: {}]
  %s4 = inlined_call_operand.vmem [shape: f32[8,256], index: 4, kind: output, shape index: {}]
  %s5 = sld [smem:[#allocation0]]
  $region49: #{wan_pde_solver_forward.1} parent=0
    _
  %s7 = ssub.s32 1, %s5
  %s8 = scalar_select 0, %s7, %s5
  loop: start=0, step=1, limit=4
  $region2: #{wan_pde_solver_forward.1} parent=0 // loop_pre_header
    _
  $region3: #{wan_pde_solver_forward.1} parent=0 // loop_header
    %s10 = sphi 0, %s14
    %p11 = scmp.ge.s32.totalorder %s10, 4
    %s20 = sphi 0, %s22
    %s23 = sphi 0, %s20
    %s24 = sphi 0, %s23
    %s40 = sphi 0, %s24
    %s44 = sphi 0, %s44
    %s46 = sphi 0, %s44
    %s47 = sphi 0, %s46
    %s61 = sphi 0, %s47
    %s65 = sphi 0, %s65
    %s67 = sphi 0, %s65
    %s68 = sphi 0, %s67
    %s82 = sphi 0, %s68
    %s86 = sphi 0, %s86
    %s88 = sphi 0, %s86
    %s89 = sphi 0, %s88
    %s103 = sphi 0, %s89
    %s109 = sphi 0, %s111
    %s112 = sphi 0, %s109
    %s113 = sphi 0, %s112
    %s129 = sphi 0, %s113
  $region4: #{wan_pde_solver_forward.1} parent=0 // loop_header_branch
    %13 = sbr.rel (%p11) target = $region8
  $region5: #{wan_pde_solver_forward.1} parent=0 // loop_body
    %s15 = ssub.s32 %s10, 1
    %s16 = ssub.s32 %s10, 2
    %s17 = sadd.s32 %s10, 1
    %s18 = ssub.s32 %s10, %s17
    %p19 = scmp.eq.s32.totalorder %s18, 0
    %s21 = sadd.s32 %s20, 1
    %s22 = scalar_select %p19, %s20, %s21
    %p25 = pneg %p19
    %p26 = scmp.eq.s32.totalorder %s10, 1
    %p27 = por %p25, %p26
    %p28 = scmp.ne.s32.totalorder %s20, %s23
    %p29 = scmp.eq.s32.totalorder %s10, 0
    %p30 = por %p28, %p29
    %p31 = scmp.ne.s32.totalorder %s20, %s23
    %p32 = scmp.eq.s32.totalorder %s15, 1
    %p33 = por %p31, %p32
    %p34 = scmp.ne.s32.totalorder %s23, %s24
    %p35 = scmp.eq.s32.totalorder %s15, 0
    %p36 = por %p34, %p35
    %p37 = scmp.ne.s32.totalorder %s23, %s24
    %p38 = scmp.eq.s32.totalorder %s16, 1
    %p39 = por %p37, %p38
    %p41 = scmp.ne.s32.totalorder %s24, %s40
    %p42 = scmp.eq.s32.totalorder %s16, 0
    %p43 = por %p41, %p42
    %s45 = sadd.s32 %s44, 1
    %p48 = scmp.eq.s32.totalorder %s10, 1
    %p49 = scmp.ne.s32.totalorder %s44, %s46
    %p50 = scmp.eq.s32.totalorder %s10, 0
    %p51 = por %p49, %p50
    %p52 = scmp.ne.s32.totalorder %s44, %s46
    %p53 = scmp.eq.s32.totalorder %s15, 1
    %p54 = por %p52, %p53
    %p55 = scmp.ne.s32.totalorder %s46, %s47
    %p56 = scmp.eq.s32.totalorder %s15, 0
    %p57 = por %p55, %p56
    %p58 = scmp.ne.s32.totalorder %s46, %s47
    %p59 = scmp.eq.s32.totalorder %s16, 1
    %p60 = por %p58, %p59
    %p62 = scmp.ne.s32.totalorder %s47, %s61
    %p63 = scmp.eq.s32.totalorder %s16, 0
    %p64 = por %p62, %p63
    %s66 = sadd.s32 %s65, 1
    %p69 = scmp.eq.s32.totalorder %s10, 1
    %p70 = scmp.ne.s32.totalorder %s65, %s67
    %p71 = scmp.eq.s32.totalorder %s10, 0
    %p72 = por %p70, %p71
    %p73 = scmp.ne.s32.totalorder %s65, %s67
    %p74 = scmp.eq.s32.totalorder %s15, 1
    %p75 = por %p73, %p74
    %p76 = scmp.ne.s32.totalorder %s67, %s68
    %p77 = scmp.eq.s32.totalorder %s15, 0
    %p78 = por %p76, %p77
    %p79 = scmp.ne.s32.totalorder %s67, %s68
    %p80 = scmp.eq.s32.totalorder %s16, 1
    %p81 = por %p79, %p80
    %p83 = scmp.ne.s32.totalorder %s68, %s82
    %p84 = scmp.eq.s32.totalorder %s16, 0
    %p85 = por %p83, %p84
    %s87 = sadd.s32 %s86, 1
    %p90 = scmp.eq.s32.totalorder %s10, 1
    %p91 = scmp.ne.s32.totalorder %s86, %s88
    %p92 = scmp.eq.s32.totalorder %s10, 0
    %p93 = por %p91, %p92
    %p94 = scmp.ne.s32.totalorder %s86, %s88
    %p95 = scmp.eq.s32.totalorder %s15, 1
    %p96 = por %p94, %p95
    %p97 = scmp.ne.s32.totalorder %s88, %s89
    %p98 = scmp.eq.s32.totalorder %s15, 0
    %p99 = por %p97, %p98
    %p100 = scmp.ne.s32.totalorder %s88, %s89
    %p101 = scmp.eq.s32.totalorder %s16, 1
    %p102 = por %p100, %p101
    %p104 = scmp.ne.s32.totalorder %s89, %s103
    %p105 = scmp.eq.s32.totalorder %s16, 0
    %p106 = por %p104, %p105
    %s107 = ssub.s32 %s10, %s17
    %p108 = scmp.eq.s32.totalorder %s107, 0
    %s110 = sadd.s32 %s109, 1
    %s111 = scalar_select %p108, %s109, %s110
    %p114 = pneg %p108
    %p115 = scmp.eq.s32.totalorder %s10, 1
    %p116 = por %p114, %p115
    %p117 = scmp.ne.s32.totalorder %s109, %s112
    %p118 = scmp.eq.s32.totalorder %s10, 0
    %p119 = por %p117, %p118
    %p120 = scmp.ne.s32.totalorder %s109, %s112
    %p121 = scmp.eq.s32.totalorder %s15, 1
    %p122 = por %p120, %p121
    %p123 = scmp.ne.s32.totalorder %s112, %s113
    %p124 = scmp.eq.s32.totalorder %s15, 0
    %p125 = por %p123, %p124
    %p126 = scmp.ne.s32.totalorder %s112, %s113
    %p127 = scmp.eq.s32.totalorder %s16, 1
    %p128 = por %p126, %p127
    %p130 = scmp.ne.s32.totalorder %s113, %s129
    %p131 = scmp.eq.s32.totalorder %s16, 0
    %p132 = por %p130, %p131
    %p133 = scmp.le.s32.totalorder 1, %s10
    %p134 = scmp.lt.s32.totalorder %s10, 3
    %p135 = pnand %p133, %p134
    %p136 = pneg %p135
    // Predicated region
    $region9: #{wan_pde_solver_forward.1} parent=5 // pred_check
      _
    $region10: #{wan_pde_solver_forward.1} parent=5 // pred_check_branch
      %138 = sbr.rel (%p135) target = $region12
    $region11: #{wan_pde_solver_forward.1} parent=5 // pred_region
      %s139 = ssub.s32 %s10, 1
      // Predicated region
      $region13: #{wan_pde_solver_forward.1} parent=11 // pred_check
        %p140 = pneg %p57
      $region14: #{wan_pde_solver_forward.1} parent=11 // pred_check_branch
        %142 = sbr.rel (%p140) target = $region16
      $region15: #{wan_pde_solver_forward.1} parent=11 // pred_region
        _
      $region16: #{wan_pde_solver_forward.1} parent=11 // pred_fallthru
        _
      // Predicated region
      $region17: #{wan_pde_solver_forward.1} parent=11 // pred_check
        %p143 = pneg %p78
      $region18: #{wan_pde_solver_forward.1} parent=11 // pred_check_branch
        %145 = sbr.rel (%p143) target = $region20
      $region19: #{wan_pde_solver_forward.1} parent=11 // pred_region
        _
      $region20: #{wan_pde_solver_forward.1} parent=11 // pred_fallthru
        _
      // Predicated region
      $region21: #{wan_pde_solver_forward.1} parent=11 // pred_check
        %p146 = pneg %p99
      $region22: #{wan_pde_solver_forward.1} parent=11 // pred_check_branch
        %148 = sbr.rel (%p146) target = $region24
      $region23: #{wan_pde_solver_forward.1} parent=11 // pred_region
        _
      $region24: #{wan_pde_solver_forward.1} parent=11 // pred_fallthru
        _
    $region12: #{wan_pde_solver_forward.1} parent=5 // pred_fallthru
      _
    %p149 = scmp.lt.s32.totalorder %s10, 2
    // Predicated region
    $region25: #{wan_pde_solver_forward.1} parent=5 // pred_check
      %p150 = pneg %p149
    $region26: #{wan_pde_solver_forward.1} parent=5 // pred_check_branch
      %152 = sbr.rel (%p150) target = $region28
    $region27: #{wan_pde_solver_forward.1} parent=5 // pred_region
      // Predicated region
      $region29: #{wan_pde_solver_forward.1} parent=27 // pred_check
        %p153 = pneg %p30
      $region30: #{wan_pde_solver_forward.1} parent=27 // pred_check_branch
        %155 = sbr.rel (%p153) target = $region32
      $region31: #{wan_pde_solver_forward.1} parent=27 // pred_region
        %p156 = scmp.lt.s32.totalorder %s10, 1
        %s157 = scalar_select %p156, %s10, 1
        %s158 = smul.addr %s157, 8
        %s159 = scalar_lea.vmem %s0, %s158
      $region32: #{wan_pde_solver_forward.1} parent=27 // pred_fallthru
        _
    $region28: #{wan_pde_solver_forward.1} parent=5 // pred_fallthru
      _
    %p160 = scmp.le.s32.totalorder 1, %s10
    %p161 = scmp.lt.s32.totalorder %s10, 3
    %p162 = pnand %p160, %p161
    %p163 = pneg %p162
    // Predicated region
    $region33: #{wan_pde_solver_forward.1} parent=5 // pred_check
      _
    $region34: #{wan_pde_solver_forward.1} parent=5 // pred_check_branch
      %165 = sbr.rel (%p162) target = $region36
    $region35: #{wan_pde_solver_forward.1} parent=5 // pred_region
      %s166 = ssub.s32 %s10, 1
      %p167 = scmp.lt.s32.totalorder %s15, 1
      %s168 = scalar_select %p167, %s15, 1
      %s169 = smul.addr %s168, 8
      %s170 = scalar_lea.vmem %s0, %s169
      %p171 = pneg %p36
      %p172 = pneg %p33
      %p173 = pneg %p57
      %p174 = pneg %p54
      %p175 = pneg %p78
      %p176 = pneg %p75
      %p177 = pneg %p99
      %p178 = pneg %p96
      %p179 = pneg %p125
      %p180 = pneg %p122
      %p181 = scmp.lt.s32.totalorder %s15, 1
      %s182 = scalar_select %p181, %s15, 1
      %s183 = smul.addr %s182, 8
      %s184 = scalar_lea.vmem %s4, %s183
      %p185 = scmp.lt.s32.totalorder %s15, 1
      %s186 = scalar_select %p185, %s15, 1
      %s187 = smul.addr %s186, 8
      %s188 = scalar_lea.vmem %s0, %s187
      %p189 = scmp.lt.s32.totalorder %s15, 1
      %s190 = scalar_select %p189, %s15, 1
      %s191 = smul.addr %s190, 8
      %s192 = scalar_lea.vmem %s4, %s191
      %v193 = vld [vmem:[%s1] sm:$0xff]
      %v194 = vld [vmem:[%s1 + $0x8] sm:$0xff]
      %v195 = vld [vmem:[%s1 + $0x10] sm:$0xff]
      %v196 = vld [vmem:[%s188] sm:$0xff]
      %v197 = vld [vmem:[%s3] sm:$0xff]
      %v198 = vld [vmem:[%s3 + $0x8] sm:$0xff]
      %v199 = vld [vmem:[%s3 + $0x10] sm:$0xff]
      %201 = vset.pattern.permute.xlu0 0
      %202 = vperm.xlu0 %201, %v197
      %v203 = vpop.permute.xlu0 %202
      %206 = vset.pattern.permute.xlu0 0
      %207 = vperm.xlu0 %206, %v198
      %v208 = vpop.permute.xlu0 %207
      %211 = vset.pattern.permute.xlu0 0
      %212 = vperm.xlu0 %211, %v199
      %v213 = vpop.permute.xlu0 %212
      %vm215 = vcmask 64512
      %v217 = vsel %vm215, %v193, 0
      %v220 = vsel %vm215, %v194, 0
      %v223 = vsel %vm215, %v195, 0
      %225 = vmatprep.subr.mxu0 0.0
      %226 = vmatpush1.msra.mxu0 %v196
      %227 = vmatprep.subr.mxu0 0.0
      %228 = vmatpush1.msra.mxu0 0.0
      %229 = vmatprep.subr.mxu0 0.0
      %230 = vmatpush1.msra.mxu0 0.0
      %231 = vmatprep.subr.mxu0 0.0
      %232 = vmatpush1.msra.mxu0 0.0
      %233 = vmatprep.subr.mxu0 0.0
      %234 = vmatpush1.msra.mxu0 0.0
      %235 = vmatprep.subr.mxu0 0.0
      %236 = vmatpush1.msra.mxu0 0.0
      %237 = vmatprep.subr.mxu0 0.0
      %238 = vmatpush1.msra.mxu0 0.0
      %239 = vmatprep.subr.mxu0 0.0
      %240 = vmatpush1.msra.mxu0 0.0
      %241 = vmatprep.subr.mxu0 0.0
      %242 = vmatpush1.msra.mxu0 0.0
      %243 = vmatprep.subr.mxu0 0.0
      %244 = vmatpush1.msra.mxu0 0.0
      %245 = vmatprep.subr.mxu0 0.0
      %246 = vmatpush1.msra.mxu0 0.0
      %247 = vmatprep.subr.mxu0 0.0
      %248 = vmatpush1.msra.mxu0 0.0
      %249 = vmatprep.subr.mxu0 0.0
      %250 = vmatpush1.msra.mxu0 0.0
      %251 = vmatprep.subr.mxu0 0.0
      %252 = vmatpush1.msra.mxu0 0.0
      %253 = vmatprep.subr.mxu0 0.0
      %254 = vmatpush1.msra.mxu0 0.0
      %255 = vmatprep.subr.mxu0 0.0
      %256 = vmatpush1.msra.mxu0 0.0
      %257 = vmatprep.subr.mxu0 0.0
      %258 = vmatpush1.msra.mxu0 0.0
      %259 = vmatprep.subr.mxu0 0.0
      %260 = vmatpush1.msra.mxu0 0.0
      %261 = vmatprep.subr.mxu0 0.0
      %262 = vmatpush1.msra.mxu0 0.0
      %263 = vmatprep.subr.mxu0 0.0
      %264 = vmatpush1.msra.mxu0 0.0
      %265 = vmatprep.subr.mxu0 0.0
      %266 = vmatpush1.msra.mxu0 0.0
      %267 = vmatprep.subr.mxu0 0.0
      %268 = vmatpush1.msra.mxu0 0.0
      %269 = vmatprep.subr.mxu0 0.0
      %270 = vmatpush1.msra.mxu0 0.0
      %271 = vmatprep.subr.mxu0 0.0
      %272 = vmatpush1.msra.mxu0 0.0
      %273 = vmatprep.subr.mxu0 0.0
      %274 = vmatpush1.msra.mxu0 0.0
      %275 = vmatprep.subr.mxu0 0.0
      %276 = vmatpush1.msra.mxu0 0.0
      %277 = vmatprep.subr.mxu0 0.0
      %278 = vmatpush1.msra.mxu0 0.0
      %279 = vmatprep.subr.mxu0 0.0
      %280 = vmatpush1.msra.mxu0 0.0
      %281 = vmatprep.subr.mxu0 0.0
      %282 = vmatpush1.msra.mxu0 0.0
      %283 = vmatprep.subr.mxu0 0.0
      %284 = vmatpush1.msra.mxu0 0.0
      %285 = vmatprep.subr.mxu0 0.0
      %286 = vmatpush1.msra.mxu0 0.0
      %287 = vmatprep.subr.mxu0 0.0
      %288 = vmatpush1.msra.mxu0 0.0
      %289 = vmatprep.mubr.f32.mxu0 0.0
      %290 = vmatmul.mubr.f32.gmra.mrb[0].mxu0 %v217
      %v291 = vpop.f32.mrb[0].mxu0
      %v292 = vadd.f32 %v203, %v291
      %v293 = vpop.f32.mrb[0].mxu0
      %294 = vmatprep.mubr.f32.mxu0 0.0
      %295 = vmatmul.mubr.f32.gmra.mrb[0].mxu0 %v220
      %v296 = vpop.f32.mrb[0].mxu0
      %v297 = vadd.f32 %v208, %v296
      %v298 = vpop.f32.mrb[0].mxu0
      %299 = vmatprep.mubr.f32.mxu0 0.0
      %300 = vmatmul.mubr.f32.gmra.mrb[0].mxu0 %v223
      %v301 = vpop.f32.mrb[0].mxu0
      %v302 = vadd.f32 %v213, %v301
      %v303 = vpop.f32.mrb[0].mxu0
      %304 = vdwg.mxu0
      %v305 = vtanh.pop %v292
      %v306 = vtanh.pop %v297
      %v307 = vtanh.pop %v302
      %v308 = vld [vmem:[%s2] sm:$0xff]
      %v309 = vld [vmem:[%s2 + $0x8] sm:$0xff]
      %v310 = vld [vmem:[%s2 + $0x10] sm:$0xff]
      %s311 = scalar_lea.vmem %s3, 24
      %v312 = vld [vmem:[%s311] sm:$0xff]
      %v313 = vld [vmem:[%s311 + $0x8] sm:$0xff]
      %v314 = vld [vmem:[%s311 + $0x10] sm:$0xff]
      %316 = vset.pattern.permute.xlu0 0
      %317 = vperm.xlu0 %316, %v312
      %v318 = vpop.permute.xlu0 %317
      %321 = vset.pattern.permute.xlu0 0
      %322 = vperm.xlu0 %321, %v313
      %v323 = vpop.permute.xlu0 %322
      %326 = vset.pattern.permute.xlu0 0
      %327 = vperm.xlu0 %326, %v314
      %v328 = vpop.permute.xlu0 %327
      %vm330 = vcmask 195584
      %v332 = vsel %vm330, %v308, 0
      %v335 = vsel %vm330, %v309, 0
      %v338 = vsel %vm330, %v310, 0
      %340 = vmatprep.subr.mxu0 0.0
      %341 = vmatpush1.msra.mxu0 %v305
      %342 = vmatprep.subr.mxu0 0.0
      %343 = vmatpush1.msra.mxu0 %v306
      %344 = vmatprep.subr.mxu0 0.0
      %345 = vmatpush1.msra.mxu0 %v307
      %346 = vmatprep.subr.mxu0 0.0
      %347 = vmatpush1.msra.mxu0 0.0
      %348 = vmatprep.subr.mxu0 0.0
      %349 = vmatpush1.msra.mxu0 0.0
      %350 = vmatprep.subr.mxu0 0.0
      %351 = vmatpush1.msra.mxu0 0.0
      %352 = vmatprep.subr.mxu0 0.0
      %353 = vmatpush1.msra.mxu0 0.0
      %354 = vmatprep.subr.mxu0 0.0
      %355 = vmatpush1.msra.mxu0 0.0
      %356 = vmatprep.subr.mxu0 0.0
      %357 = vmatpush1.msra.mxu0 0.0
      %358 = vmatprep.subr.mxu0 0.0
      %359 = vmatpush1.msra.mxu0 0.0
      %360 = vmatprep.subr.mxu0 0.0
      %361 = vmatpush1.msra.mxu0 0.0
      %362 = vmatprep.subr.mxu0 0.0
      %363 = vmatpush1.msra.mxu0 0.0
      %364 = vmatprep.subr.mxu0 0.0
      %365 = vmatpush1.msra.mxu0 0.0
      %366 = vmatprep.subr.mxu0 0.0
      %367 = vmatpush1.msra.mxu0 0.0
      %368 = vmatprep.subr.mxu0 0.0
      %369 = vmatpush1.msra.mxu0 0.0
      %370 = vmatprep.subr.mxu0 0.0
      %371 = vmatpush1.msra.mxu0 0.0
      %372 = vmatprep.subr.mxu0 0.0
      %373 = vmatpush1.msra.mxu0 0.0
      %374 = vmatprep.subr.mxu0 0.0
      %375 = vmatpush1.msra.mxu0 0.0
      %376 = vmatprep.subr.mxu0 0.0
      %377 = vmatpush1.msra.mxu0 0.0
      %378 = vmatprep.subr.mxu0 0.0
      %379 = vmatpush1.msra.mxu0 0.0
      %380 = vmatprep.subr.mxu0 0.0
      %381 = vmatpush1.msra.mxu0 0.0
      %382 = vmatprep.subr.mxu0 0.0
      %383 = vmatpush1.msra.mxu0 0.0
      %384 = vmatprep.subr.mxu0 0.0
      %385 = vmatpush1.msra.mxu0 0.0
      %386 = vmatprep.subr.mxu0 0.0
      %387 = vmatpush1.msra.mxu0 0.0
      %388 = vmatprep.subr.mxu0 0.0
      %389 = vmatpush1.msra.mxu0 0.0
      %390 = vmatprep.subr.mxu0 0.0
      %391 = vmatpush1.msra.mxu0 0.0
      %392 = vmatprep.subr.mxu0 0.0
      %393 = vmatpush1.msra.mxu0 0.0
      %394 = vmatprep.subr.mxu0 0.0
      %395 = vmatpush1.msra.mxu0 0.0
      %396 = vmatprep.subr.mxu0 0.0
      %397 = vmatpush1.msra.mxu0 0.0
      %398 = vmatprep.subr.mxu0 0.0
      %399 = vmatpush1.msra.mxu0 0.0
      %400 = vmatprep.subr.mxu0 0.0
      %401 = vmatpush1.msra.mxu0 0.0
      %402 = vmatprep.subr.mxu0 0.0
      %403 = vmatpush1.msra.mxu0 0.0
      %404 = vmatprep.mubr.f32.mxu0 0.0
      %405 = vmatmul.mubr.f32.gmra.mrb[0].mxu0 %v332
      %v406 = vpop.f32.mrb[0].mxu0
      %v407 = vadd.f32 %v318, %v406
      %v408 = vpop.f32.mrb[0].mxu0
      %409 = vmatprep.mubr.f32.mxu0 0.0
      %410 = vmatmul.mubr.f32.gmra.mrb[0].mxu0 %v335
      %v411 = vpop.f32.mrb[0].mxu0
      %v412 = vadd.f32 %v323, %v411
      %v413 = vpop.f32.mrb[0].mxu0
      %414 = vmatprep.mubr.f32.mxu0 0.0
      %415 = vmatmul.mubr.f32.gmra.mrb[0].mxu0 %v338
      %v416 = vpop.f32.mrb[0].mxu0
      %v417 = vadd.f32 %v328, %v416
      %v418 = vpop.f32.mrb[0].mxu0
      %419 = vdwg.mxu0
      %v420 = vtanh.pop %v407
      %v421 = vtanh.pop %v412
      %v422 = vtanh.pop %v417
      %s423 = scalar_lea.vmem %s2, 24
      %v424 = vld [vmem:[%s423] sm:$0xff]
      %v425 = vld [vmem:[%s423 + $0x8] sm:$0xff]
      %v426 = vld [vmem:[%s423 + $0x10] sm:$0xff]
      %s427 = scalar_lea.vmem %s3, 48
      %v428 = vld [vmem:[%s427] sm:$0xff]
      %v429 = vld [vmem:[%s427 + $0x8] sm:$0xff]
      %v430 = vld [vmem:[%s427 + $0x10] sm:$0xff]
      %432 = vset.pattern.permute.xlu0 0
      %433 = vperm.xlu0 %432, %v428
      %v434 = vpop.permute.xlu0 %433
      %437 = vset.pattern.permute.xlu0 0
      %438 = vperm.xlu0 %437, %v429
      %v439 = vpop.permute.xlu0 %438
      %442 = vset.pattern.permute.xlu0 0
      %443 = vperm.xlu0 %442, %v430
      %v444 = vpop.permute.xlu0 %443
      %v447 = vsel %vm330, %v424, 0
      %v450 = vsel %vm330, %v425, 0
      %v453 = vsel %vm330, %v426, 0
      %455 = vmatprep.subr.mxu0 0.0
      %456 = vmatpush1.msra.mxu0 %v420
      %457 = vmatprep.subr.mxu0 0.0
      %458 = vmatpush1.msra.mxu0 %v421
      %459 = vmatprep.subr.mxu0 0.0
      %460 = vmatpush1.msra.mxu0 %v422
      %461 = vmatprep.subr.mxu0 0.0
      %462 = vmatpush1.msra.mxu0 0.0
      %463 = vmatprep.subr.mxu0 0.0
      %464 = vmatpush1.msra.mxu0 0.0
      %465 = vmatprep.subr.mxu0 0.0
      %466 = vmatpush1.msra.mxu0 0.0
      %467 = vmatprep.subr.mxu0 0.0
      %468 = vmatpush1.msra.mxu0 0.0
      %469 = vmatprep.subr.mxu0 0.0
      %470 = vmatpush1.msra.mxu0 0.0
      %471 = vmatprep.subr.mxu0 0.0
      %472 = vmatpush1.msra.mxu0 0.0
      %473 = vmatprep.subr.mxu0 0.0
      %474 = vmatpush1.msra.mxu0 0.0
      %475 = vmatprep.subr.mxu0 0.0
      %476 = vmatpush1.msra.mxu0 0.0
      %477 = vmatprep.subr.mxu0 0.0
      %478 = vmatpush1.msra.mxu0 0.0
      %479 = vmatprep.subr.mxu0 0.0
      %480 = vmatpush1.msra.mxu0 0.0
      %481 = vmatprep.subr.mxu0 0.0
      %482 = vmatpush1.msra.mxu0 0.0
      %483 = vmatprep.subr.mxu0 0.0
      %484 = vmatpush1.msra.mxu0 0.0
      %485 = vmatprep.subr.mxu0 0.0
      %486 = vmatpush1.msra.mxu0 0.0
      %487 = vmatprep.subr.mxu0 0.0
      %488 = vmatpush1.msra.mxu0 0.0
      %489 = vmatprep.subr.mxu0 0.0
      %490 = vmatpush1.msra.mxu0 0.0
      %491 = vmatprep.subr.mxu0 0.0
      %492 = vmatpush1.msra.mxu0 0.0
      %493 = vmatprep.subr.mxu0 0.0
      %494 = vmatpush1.msra.mxu0 0.0
      %495 = vmatprep.subr.mxu0 0.0
      %496 = vmatpush1.msra.mxu0 0.0
      %497 = vmatprep.subr.mxu0 0.0
      %498 = vmatpush1.msra.mxu0 0.0
      %499 = vmatprep.subr.mxu0 0.0
      %500 = vmatpush1.msra.mxu0 0.0
      %501 = vmatprep.subr.mxu0 0.0
      %502 = vmatpush1.msra.mxu0 0.0
      %503 = vmatprep.subr.mxu0 0.0
      %504 = vmatpush1.msra.mxu0 0.0
      %505 = vmatprep.subr.mxu0 0.0
      %506 = vmatpush1.msra.mxu0 0.0
      %507 = vmatprep.subr.mxu0 0.0
      %508 = vmatpush1.msra.mxu0 0.0
      %509 = vmatprep.subr.mxu0 0.0
      %510 = vmatpush1.msra.mxu0 0.0
      %511 = vmatprep.subr.mxu0 0.0
      %512 = vmatpush1.msra.mxu0 0.0
      %513 = vmatprep.subr.mxu0 0.0
      %514 = vmatpush1.msra.mxu0 0.0
      %515 = vmatprep.subr.mxu0 0.0
      %516 = vmatpush1.msra.mxu0 0.0
      %517 = vmatprep.subr.mxu0 0.0
      %518 = vmatpush1.msra.mxu0 0.0
      %519 = vmatprep.mubr.f32.mxu0 0.0
      %520 = vmatmul.mubr.f32.gmra.mrb[0].mxu0 %v447
      %v521 = vpop.f32.mrb[0].mxu0
      %v522 = vadd.f32 %v434, %v521
      %v523 = vpop.f32.mrb[0].mxu0
      %524 = vmatprep.mubr.f32.mxu0 0.0
      %525 = vmatmul.mubr.f32.gmra.mrb[0].mxu0 %v450
      %v526 = vpop.f32.mrb[0].mxu0
      %v527 = vadd.f32 %v439, %v526
      %v528 = vpop.f32.mrb[0].mxu0
      %529 = vmatprep.mubr.f32.mxu0 0.0
      %530 = vmatmul.mubr.f32.gmra.mrb[0].mxu0 %v453
      %v531 = vpop.f32.mrb[0].mxu0
      %v532 = vadd.f32 %v444, %v531
      %v533 = vpop.f32.mrb[0].mxu0
      %534 = vdwg.mxu0
      %v535 = vmax.f32 %v522, 0.0
      %v536 = vmax.f32 %v527, 0.0
      %v537 = vmax.f32 %v532, 0.0
      %v538 = vand.u32 2147483647, %v522
      %v539 = vand.u32 2147483647, %v527
      %v540 = vand.u32 2147483647, %v532
      %v541 = vsub.f32 0.0, %v538
      %v542 = vsub.f32 0.0, %v539
      %v543 = vsub.f32 0.0, %v540
      %v544 = vmul.f32 %v541, 1.442695
      %v545 = vpow.pop %v544
      %v546 = vmul.f32 %v542, 1.442695
      %v547 = vpow.pop %v546
      %v548 = vmul.f32 %v543, 1.442695
      %v549 = vpow.pop %v548
      %v550 = vadd.f32 %v545, 1.0
      %v551 = vlog2.pop %v550
      %v552 = vmul.f32 %v551, 0.6931472
      %v553 = vmul.f32 -0.5, %v545
      %v554 = vadd.f32 %v553, 1.0
      %v555 = vmul.f32 %v554, %v545
      %v556 = vand.u32 2147483647, %v545
      %vm557 = vcmp.lt.f32.partialorder %v556, 0.0004427343
      %v558 = vsel %vm557, %v555, %v552
      %v559 = vadd.f32 %v547, 1.0
      %v560 = vlog2.pop %v559
      %v561 = vmul.f32 %v560, 0.6931472
      %v562 = vmul.f32 -0.5, %v547
      %v563 = vadd.f32 %v562, 1.0
      %v564 = vmul.f32 %v563, %v547
      %v565 = vand.u32 2147483647, %v547
      %vm566 = vcmp.lt.f32.partialorder %v565, 0.0004427343
      %v567 = vsel %vm566, %v564, %v561
      %v568 = vadd.f32 %v549, 1.0
      %v569 = vlog2.pop %v568
      %v570 = vmul.f32 %v569, 0.6931472
      %v571 = vmul.f32 -0.5, %v549
      %v572 = vadd.f32 %v571, 1.0
      %v573 = vmul.f32 %v572, %v549
      %v574 = vand.u32 2147483647, %v549
      %vm575 = vcmp.lt.f32.partialorder %v574, 0.0004427343
      %v576 = vsel %vm575, %v573, %v570
      %v577 = vadd.f32 %v535, %v558
      %v578 = vadd.f32 %v536, %v567
      %v579 = vadd.f32 %v537, %v576
      %s580 = scalar_lea.vmem %s2, 48
      %v581 = vld [vmem:[%s580] sm:$0xff]
      %v582 = vld [vmem:[%s580 + $0x8] sm:$0xff]
      %v583 = vld [vmem:[%s580 + $0x10] sm:$0xff]
      %s584 = scalar_lea.vmem %s3, 72
      %v585 = vld [vmem:[%s584] sm:$0xff]
      %v586 = vld [vmem:[%s584 + $0x8] sm:$0xff]
      %v587 = vld [vmem:[%s584 + $0x10] sm:$0xff]
      %589 = vset.pattern.permute.xlu0 0
      %590 = vperm.xlu0 %589, %v585
      %v591 = vpop.permute.xlu0 %590
      %594 = vset.pattern.permute.xlu0 0
      %595 = vperm.xlu0 %594, %v586
      %v596 = vpop.permute.xlu0 %595
      %599 = vset.pattern.permute.xlu0 0
      %600 = vperm.xlu0 %599, %v587
      %v601 = vpop.permute.xlu0 %600
      %v604 = vsel %vm330, %v581, 0
      %v607 = vsel %vm330, %v582, 0
      %v610 = vsel %vm330, %v583, 0
      %612 = vmatprep.subr.mxu0 0.0
      %613 = vmatpush1.msra.mxu0 %v577
      %614 = vmatprep.subr.mxu0 0.0
      %615 = vmatpush1.msra.mxu0 %v578
      %616 = vmatprep.subr.mxu0 0.0
      %617 = vmatpush1.msra.mxu0 %v579
      %618 = vmatprep.subr.mxu0 0.0
      %619 = vmatpush1.msra.mxu0 0.0
      %620 = vmatprep.subr.mxu0 0.0
      %621 = vmatpush1.msra.mxu0 0.0
      %622 = vmatprep.subr.mxu0 0.0
      %623 = vmatpush1.msra.mxu0 0.0
      %624 = vmatprep.subr.mxu0 0.0
      %625 = vmatpush1.msra.mxu0 0.0
      %626 = vmatprep.subr.mxu0 0.0
      %627 = vmatpush1.msra.mxu0 0.0
      %628 = vmatprep.subr.mxu0 0.0
      %629 = vmatpush1.msra.mxu0 0.0
      %630 = vmatprep.subr.mxu0 0.0
      %631 = vmatpush1.msra.mxu0 0.0
      %632 = vmatprep.subr.mxu0 0.0
      %633 = vmatpush1.msra.mxu0 0.0
      %634 = vmatprep.subr.mxu0 0.0
      %635 = vmatpush1.msra.mxu0 0.0
      %636 = vmatprep.subr.mxu0 0.0
      %637 = vmatpush1.msra.mxu0 0.0
      %638 = vmatprep.subr.mxu0 0.0
      %639 = vmatpush1.msra.mxu0 0.0
      %640 = vmatprep.subr.mxu0 0.0
      %641 = vmatpush1.msra.mxu0 0.0
      %642 = vmatprep.subr.mxu0 0.0
      %643 = vmatpush1.msra.mxu0 0.0
      %644 = vmatprep.subr.mxu0 0.0
      %645 = vmatpush1.msra.mxu0 0.0
      %646 = vmatprep.subr.mxu0 0.0
      %647 = vmatpush1.msra.mxu0 0.0
      %648 = vmatprep.subr.mxu0 0.0
      %649 = vmatpush1.msra.mxu0 0.0
      %650 = vmatprep.subr.mxu0 0.0
      %651 = vmatpush1.msra.mxu0 0.0
      %652 = vmatprep.subr.mxu0 0.0
      %653 = vmatpush1.msra.mxu0 0.0
      %654 = vmatprep.subr.mxu0 0.0
      %655 = vmatpush1.msra.mxu0 0.0
      %656 = vmatprep.subr.mxu0 0.0
      %657 = vmatpush1.msra.mxu0 0.0
      %658 = vmatprep.subr.mxu0 0.0
      %659 = vmatpush1.msra.mxu0 0.0
      %660 = vmatprep.subr.mxu0 0.0
      %661 = vmatpush1.msra.mxu0 0.0
      %662 = vmatprep.subr.mxu0 0.0
      %663 = vmatpush1.msra.mxu0 0.0
      %664 = vmatprep.subr.mxu0 0.0
      %665 = vmatpush1.msra.mxu0 0.0
      %666 = vmatprep.subr.mxu0 0.0
      %667 = vmatpush1.msra.mxu0 0.0
      %668 = vmatprep.subr.mxu0 0.0
      %669 = vmatpush1.msra.mxu0 0.0
      %670 = vmatprep.subr.mxu0 0.0
      %671 = vmatpush1.msra.mxu0 0.0
      %672 = vmatprep.subr.mxu0 0.0
      %673 = vmatpush1.msra.mxu0 0.0
      %674 = vmatprep.subr.mxu0 0.0
      %675 = vmatpush1.msra.mxu0 0.0
      %676 = vmatprep.mubr.f32.mxu0 0.0
      %677 = vmatmul.mubr.f32.gmra.mrb[0].mxu0 %v604
      %v678 = vpop.f32.mrb[0].mxu0
      %v679 = vadd.f32 %v591, %v678
      %v680 = vpop.f32.mrb[0].mxu0
      %681 = vmatprep.mubr.f32.mxu0 0.0
      %682 = vmatmul.mubr.f32.gmra.mrb[0].mxu0 %v607
      %v683 = vpop.f32.mrb[0].mxu0
      %v684 = vadd.f32 %v596, %v683
      %v685 = vpop.f32.mrb[0].mxu0
      %686 = vmatprep.mubr.f32.mxu0 0.0
      %687 = vmatmul.mubr.f32.gmra.mrb[0].mxu0 %v610
      %v688 = vpop.f32.mrb[0].mxu0
      %v689 = vadd.f32 %v601, %v688
      %v690 = vpop.f32.mrb[0].mxu0
      %691 = vdwg.mxu0
      %v692 = vand.u32 2147483647, %v679
      %vm693 = vcmp.le.f32.partialorder %v692, 0.7853982
      %vm694 = vcmp.lt.s32.totalorder %v679, 0
      %v695 = vand.u32 %v679, 2139095040
      %v696 = vshrl.u32 %v695, 23
      %v697 = vsub.s32 %v696, 127
      %v698 = vand.u32 2147483647, %v679
      %v699 = vand.u32 %v698, 8388607
      %v700 = vor.u32 %v699, 8388608
      %v701 = vsub.s32 0, %v700
      %v702 = vadd.s32 %v697, 1
      %vm703 = vcmp.gt.s32.totalorder %v702, 0
      %v704 = vsel %vm703, %v702, 0
      %v705 = vshrl.u32 %v704, 5
      %v706 = vand.u32 %v704, 31
      %v707 = vsub.s32 32, %v706
      %v708 = vshrl.u32 683565275, %v707
      %v709 = vshll.u32 683565275, %v706
      %v710 = vshrl.u32 2475754826, %v707
      %v711 = vor.u32 %v709, %v710
      %v712 = vshll.u32 2475754826, %v706
      %v713 = vshrl.u32 2131351028, %v707
      %v714 = vor.u32 %v712, %v713
      %v715 = vshll.u32 2131351028, %v706
      %v716 = vshrl.u32 2102212464, %v707
      %v717 = vor.u32 %v715, %v716
      %v718 = vshll.u32 2102212464, %v706
      %v719 = vshrl.u32 920167782, %v707
      %v720 = vor.u32 %v718, %v719
      %v721 = vshll.u32 920167782, %v706
      %v722 = vshrl.u32 1326507024, %v707
      %v723 = vor.u32 %v721, %v722
      %vm724 = vcmp.lt.s32.totalorder %v705, 1
      %vm725 = vcmp.lt.s32.totalorder %v705, 2
      %vm726 = vcmp.lt.s32.totalorder %v705, 3
      %vm727 = vcmp.lt.s32.totalorder %v705, 4
      %v728 = vsel %vm724, %v708, %v711
      %v729 = vsel %vm727, %v717, 2102212464
      %v730 = vsel %vm726, %v714, %v729
      %v731 = vsel %vm725, %v728, %v730
      %v732 = vsel %vm724, %v711, %v714
      %v733 = vsel %vm727, %v720, 920167782
      %v734 = vsel %vm726, %v717, %v733
      %v735 = vsel %vm725, %v732, %v734
      %v736 = vsel %vm724, %v714, %v717
      %v737 = vsel %vm727, %v723, 1326507024
      %v738 = vsel %vm726, %v720, %v737
      %v739 = vsel %vm725, %v736, %v738
      %v740 = vshll.u32 %v700, 8
      %v741 = vmul.u32.u64.compose %v740, %v739
      %v742 = vextract.low.u32 %v741
      %v743 = vextract.high.u32 %v741
      %v744 = vmul.u32.u64.compose %v740, %v735
      %v745 = vextract.low.u32 %v744
      %v746 = vextract.high.u32 %v744
      %v747 = vmul.u32 %v740, %v731
      %v748 = vadd.s32 %v743, %v745
      %vm749 = vc.u32 %v743, %v745
      %v750 = vadd.s32 %v746, 1
      %v751 = vsel %vm749, %v750, %v746
      %v752 = vadd.s32 %v747, %v751
      %v753 = vadd.s32 %v752, 536870912
      %v754 = vshrl.u32 %v753, 30
      %v755 = vshll.u32 %v754, 30
      %v756 = vsub.s32 %v752, %v755
      %vm757 = vcmp.lt.s32.totalorder %v756, 0
      %v758 = vsub.s32 0, %v756
      %v759 = vsel %vm757, %v758, %v756
      %v760 = vclz %v759
      %v761 = vsub.s32 %v760, 2
      %vm762 = vcmp.gt.s32.totalorder 0, %v761
      %v763 = vsel %vm762, 0, %v761
      %v764 = vsub.s32 32, %v763
      %v765 = vshll.u32 %v756, %v763
      %v766 = vshrl.u32 %v748, %v764
      %v767 = vor.u32 %v765, %v766
      %v768 = vsub.s32 4294967266, %v763
      %v769 = vadd.s32 %v768, 127
      %v770 = vshll.u32 %v769, 23
      %v771 = vor.u32 4788187, %v770
      %v772 = vand.u32 2147483647, %v771
      %v774 = vcvt.s32.f32 %v767
      %v775 = vmul.f32 %v774, %v772
      %v776 = vxor.u32 %v775, 2147483648
      %v777 = vsel %vm694, %v776, %v775
      %v778 = vsub.s32 4, %v754
      %v779 = vsel %vm694, %v778, %v754
      %v780 = vsel %vm693, %v679, %v777
      %v781 = vsel %vm693, 0, %v779
      %v782 = vcosq.f32.pop %v780
      %v783 = vsinq.f32.pop %v780
      %vm784 = vweird.f32 %v679
      %v785 = vadd.s32 %v781, 3
      %v786 = vand.u32 %v785, 3
      %vm787 = vcmp.lt.s32.totalorder %v786, 2
      %vm788 = vcmp.eq.s32.totalorder %v786, 0
      %v789 = vxor.u32 %v783, 2147483648
      %v790 = vsel %vm788, %v782, %v789
      %vm791 = vcmp.eq.s32.totalorder %v786, 2
      %v792 = vxor.u32 %v782, 2147483648
      %v793 = vsel %vm791, %v792, %v783
      %v794 = vsel %vm787, %v790, %v793
      %v795 = vsel %vm784, nan, %v794
      %v796 = vand.u32 2147483647, %v684
      %vm797 = vcmp.le.f32.partialorder %v796, 0.7853982
      %vm798 = vcmp.lt.s32.totalorder %v684, 0
      %v799 = vand.u32 %v684, 2139095040
      %v800 = vshrl.u32 %v799, 23
      %v801 = vsub.s32 %v800, 127
      %v802 = vand.u32 2147483647, %v684
      %v803 = vand.u32 %v802, 8388607
      %v804 = vor.u32 %v803, 8388608
      %v805 = vsub.s32 0, %v804
      %v806 = vadd.s32 %v801, 1
      %vm807 = vcmp.gt.s32.totalorder %v806, 0
      %v808 = vsel %vm807, %v806, 0
      %v809 = vshrl.u32 %v808, 5
      %v810 = vand.u32 %v808, 31
      %v811 = vsub.s32 32, %v810
      %v812 = vshrl.u32 683565275, %v811
      %v813 = vshll.u32 683565275, %v810
      %v814 = vshrl.u32 2475754826, %v811
      %v815 = vor.u32 %v813, %v814
      %v816 = vshll.u32 2475754826, %v810
      %v817 = vshrl.u32 2131351028, %v811
      %v818 = vor.u32 %v816, %v817
      %v819 = vshll.u32 2131351028, %v810
      %v820 = vshrl.u32 2102212464, %v811
      %v821 = vor.u32 %v819, %v820
      %v822 = vshll.u32 2102212464, %v810
      %v823 = vshrl.u32 920167782, %v811
      %v824 = vor.u32 %v822, %v823
      %v825 = vshll.u32 920167782, %v810
      %v826 = vshrl.u32 1326507024, %v811
      %v827 = vor.u32 %v825, %v826
      %vm828 = vcmp.lt.s32.totalorder %v809, 1
      %vm829 = vcmp.lt.s32.totalorder %v809, 2
      %vm830 = vcmp.lt.s32.totalorder %v809, 3
      %vm831 = vcmp.lt.s32.totalorder %v809, 4
      %v832 = vsel %vm828, %v812, %v815
      %v833 = vsel %vm831, %v821, 2102212464
      %v834 = vsel %vm830, %v818, %v833
      %v835 = vsel %vm829, %v832, %v834
      %v836 = vsel %vm828, %v815, %v818
      %v837 = vsel %vm831, %v824, 920167782
      %v838 = vsel %vm830, %v821, %v837
      %v839 = vsel %vm829, %v836, %v838
      %v840 = vsel %vm828, %v818, %v821
      %v841 = vsel %vm831, %v827, 1326507024
      %v842 = vsel %vm830, %v824, %v841
      %v843 = vsel %vm829, %v840, %v842
      %v844 = vshll.u32 %v804, 8
      %v845 = vmul.u32.u64.compose %v844, %v843
      %v846 = vextract.low.u32 %v845
      %v847 = vextract.high.u32 %v845
      %v848 = vmul.u32.u64.compose %v844, %v839
      %v849 = vextract.low.u32 %v848
      %v850 = vextract.high.u32 %v848
      %v851 = vmul.u32 %v844, %v835
      %v852 = vadd.s32 %v847, %v849
      %vm853 = vc.u32 %v847, %v849
      %v854 = vadd.s32 %v850, 1
      %v855 = vsel %vm853, %v854, %v850
      %v856 = vadd.s32 %v851, %v855
      %v857 = vadd.s32 %v856, 536870912
      %v858 = vshrl.u32 %v857, 30
      %v859 = vshll.u32 %v858, 30
      %v860 = vsub.s32 %v856, %v859
      %vm861 = vcmp.lt.s32.totalorder %v860, 0
      %v862 = vsub.s32 0, %v860
      %v863 = vsel %vm861, %v862, %v860
      %v864 = vclz %v863
      %v865 = vsub.s32 %v864, 2
      %vm866 = vcmp.gt.s32.totalorder 0, %v865
      %v867 = vsel %vm866, 0, %v865
      %v868 = vsub.s32 32, %v867
      %v869 = vshll.u32 %v860, %v867
      %v870 = vshrl.u32 %v852, %v868
      %v871 = vor.u32 %v869, %v870
      %v872 = vsub.s32 4294967266, %v867
      %v873 = vadd.s32 %v872, 127
      %v874 = vshll.u32 %v873, 23
      %v875 = vor.u32 4788187, %v874
      %v876 = vand.u32 2147483647, %v875
      %v878 = vcvt.s32.f32 %v871
      %v879 = vmul.f32 %v878, %v876
      %v880 = vxor.u32 %v879, 2147483648
      %v881 = vsel %vm798, %v880, %v879
      %v882 = vsub.s32 4, %v858
      %v883 = vsel %vm798, %v882, %v858
      %v884 = vsel %vm797, %v684, %v881
      %v885 = vsel %vm797, 0, %v883
      %v886 = vcosq.f32.pop %v884
      %v887 = vsinq.f32.pop %v884
      %vm888 = vweird.f32 %v684
      %v889 = vadd.s32 %v885, 3
      %v890 = vand.u32 %v889, 3
      %vm891 = vcmp.lt.s32.totalorder %v890, 2
      %vm892 = vcmp.eq.s32.totalorder %v890, 0
      %v893 = vxor.u32 %v887, 2147483648
      %v894 = vsel %vm892, %v886, %v893
      %vm895 = vcmp.eq.s32.totalorder %v890, 2
      %v896 = vxor.u32 %v886, 2147483648
      %v897 = vsel %vm895, %v896, %v887
      %v898 = vsel %vm891, %v894, %v897
      %v899 = vsel %vm888, nan, %v898
      %v900 = vand.u32 2147483647, %v689
      %vm901 = vcmp.le.f32.partialorder %v900, 0.7853982
      %vm902 = vcmp.lt.s32.totalorder %v689, 0
      %v903 = vand.u32 %v689, 2139095040
      %v904 = vshrl.u32 %v903, 23
      %v905 = vsub.s32 %v904, 127
      %v906 = vand.u32 2147483647, %v689
      %v907 = vand.u32 %v906, 8388607
      %v908 = vor.u32 %v907, 8388608
      %v909 = vsub.s32 0, %v908
      %v910 = vadd.s32 %v905, 1
      %vm911 = vcmp.gt.s32.totalorder %v910, 0
      %v912 = vsel %vm911, %v910, 0
      %v913 = vshrl.u32 %v912, 5
      %v914 = vand.u32 %v912, 31
      %v915 = vsub.s32 32, %v914
      %v916 = vshrl.u32 683565275, %v915
      %v917 = vshll.u32 683565275, %v914
      %v918 = vshrl.u32 2475754826, %v915
      %v919 = vor.u32 %v917, %v918
      %v920 = vshll.u32 2475754826, %v914
      %v921 = vshrl.u32 2131351028, %v915
      %v922 = vor.u32 %v920, %v921
      %v923 = vshll.u32 2131351028, %v914
      %v924 = vshrl.u32 2102212464, %v915
      %v925 = vor.u32 %v923, %v924
      %v926 = vshll.u32 2102212464, %v914
      %v927 = vshrl.u32 920167782, %v915
      %v928 = vor.u32 %v926, %v927
      %v929 = vshll.u32 920167782, %v914
      %v930 = vshrl.u32 1326507024, %v915
      %v931 = vor.u32 %v929, %v930
      %vm932 = vcmp.lt.s32.totalorder %v913, 1
      %vm933 = vcmp.lt.s32.totalorder %v913, 2
      %vm934 = vcmp.lt.s32.totalorder %v913, 3
      %vm935 = vcmp.lt.s32.totalorder %v913, 4
      %v936 = vsel %vm932, %v916, %v919
      %v937 = vsel %vm935, %v925, 2102212464
      %v938 = vsel %vm934, %v922, %v937
      %v939 = vsel %vm933, %v936, %v938
      %v940 = vsel %vm932, %v919, %v922
      %v941 = vsel %vm935, %v928, 920167782
      %v942 = vsel %vm934, %v925, %v941
      %v943 = vsel %vm933, %v940, %v942
      %v944 = vsel %vm932, %v922, %v925
      %v945 = vsel %vm935, %v931, 1326507024
      %v946 = vsel %vm934, %v928, %v945
      %v947 = vsel %vm933, %v944, %v946
      %v948 = vshll.u32 %v908, 8
      %v949 = vmul.u32.u64.compose %v948, %v947
      %v950 = vextract.low.u32 %v949
      %v951 = vextract.high.u32 %v949
      %v952 = vmul.u32.u64.compose %v948, %v943
      %v953 = vextract.low.u32 %v952
      %v954 = vextract.high.u32 %v952
      %v955 = vmul.u32 %v948, %v939
      %v956 = vadd.s32 %v951, %v953
      %vm957 = vc.u32 %v951, %v953
      %v958 = vadd.s32 %v954, 1
      %v959 = vsel %vm957, %v958, %v954
      %v960 = vadd.s32 %v955, %v959
      %v961 = vadd.s32 %v960, 536870912
      %v962 = vshrl.u32 %v961, 30
      %v963 = vshll.u32 %v962, 30
      %v964 = vsub.s32 %v960, %v963
      %vm965 = vcmp.lt.s32.totalorder %v964, 0
      %v966 = vsub.s32 0, %v964
      %v967 = vsel %vm965, %v966, %v964
      %v968 = vclz %v967
      %v969 = vsub.s32 %v968, 2
      %vm970 = vcmp.gt.s32.totalorder 0, %v969
      %v971 = vsel %vm970, 0, %v969
      %v972 = vsub.s32 32, %v971
      %v973 = vshll.u32 %v964, %v971
      %v974 = vshrl.u32 %v956, %v972
      %v975 = vor.u32 %v973, %v974
      %v976 = vsub.s32 4294967266, %v971
      %v977 = vadd.s32 %v976, 127
      %v978 = vshll.u32 %v977, 23
      %v979 = vor.u32 4788187, %v978
      %v980 = vand.u32 2147483647, %v979
      %v982 = vcvt.s32.f32 %v975
      %v983 = vmul.f32 %v982, %v980
      %v984 = vxor.u32 %v983, 2147483648
      %v985 = vsel %vm902, %v984, %v983
      %v986 = vsub.s32 4, %v962
      %v987 = vsel %vm902, %v986, %v962
      %v988 = vsel %vm901, %v689, %v985
      %v989 = vsel %vm901, 0, %v987
      %v990 = vcosq.f32.pop %v988
      %v991 = vsinq.f32.pop %v988
      %vm992 = vweird.f32 %v689
      %v993 = vadd.s32 %v989, 3
      %v994 = vand.u32 %v993, 3
      %vm995 = vcmp.lt.s32.totalorder %v994, 2
      %vm996 = vcmp.eq.s32.totalorder %v994, 0
      %v997 = vxor.u32 %v991, 2147483648
      %v998 = vsel %vm996, %v990, %v997
      %vm999 = vcmp.eq.s32.totalorder %v994, 2
      %v1000 = vxor.u32 %v990, 2147483648
      %v1001 = vsel %vm999, %v1000, %v991
      %v1002 = vsel %vm995, %v998, %v1001
      %v1003 = vsel %vm992, nan, %v1002
      %s1004 = scalar_lea.vmem %s2, 72
      %v1005 = vld [vmem:[%s1004] sm:$0xff]
      %v1006 = vld [vmem:[%s1004 + $0x8] sm:$0xff]
      %v1007 = vld [vmem:[%s1004 + $0x10] sm:$0xff]
      %s1008 = scalar_lea.vmem %s3, 96
      %v1009 = vld [vmem:[%s1008] sm:$0xff]
      %v1010 = vld [vmem:[%s1008 + $0x8] sm:$0xff]
      %v1011 = vld [vmem:[%s1008 + $0x10] sm:$0xff]
      %1013 = vset.pattern.permute.xlu0 0
      %1014 = vperm.xlu0 %1013, %v1009
      %v1015 = vpop.permute.xlu0 %1014
      %1018 = vset.pattern.permute.xlu0 0
      %1019 = vperm.xlu0 %1018, %v1010
      %v1020 = vpop.permute.xlu0 %1019
      %1023 = vset.pattern.permute.xlu0 0
      %1024 = vperm.xlu0 %1023, %v1011
      %v1025 = vpop.permute.xlu0 %1024
      %v1028 = vsel %vm330, %v1005, 0
      %v1031 = vsel %vm330, %v1006, 0
      %v1034 = vsel %vm330, %v1007, 0
      %1036 = vmatprep.subr.mxu0 0.0
      %1037 = vmatpush1.msra.mxu0 %v795
      %1038 = vmatprep.subr.mxu0 0.0
      %1039 = vmatpush1.msra.mxu0 %v899
      %1040 = vmatprep.subr.mxu0 0.0
      %1041 = vmatpush1.msra.mxu0 %v1003
      %1042 = vmatprep.subr.mxu0 0.0
      %1043 = vmatpush1.msra.mxu0 0.0
      %1044 = vmatprep.subr.mxu0 0.0
      %1045 = vmatpush1.msra.mxu0 0.0
      %1046 = vmatprep.subr.mxu0 0.0
      %1047 = vmatpush1.msra.mxu0 0.0
      %1048 = vmatprep.subr.mxu0 0.0
      %1049 = vmatpush1.msra.mxu0 0.0
      %1050 = vmatprep.subr.mxu0 0.0
      %1051 = vmatpush1.msra.mxu0 0.0
      %1052 = vmatprep.subr.mxu0 0.0
      %1053 = vmatpush1.msra.mxu0 0.0
      %1054 = vmatprep.subr.mxu0 0.0
      %1055 = vmatpush1.msra.mxu0 0.0
      %1056 = vmatprep.subr.mxu0 0.0
      %1057 = vmatpush1.msra.mxu0 0.0
      %1058 = vmatprep.subr.mxu0 0.0
      %1059 = vmatpush1.msra.mxu0 0.0
      %1060 = vmatprep.subr.mxu0 0.0
      %1061 = vmatpush1.msra.mxu0 0.0
      %1062 = vmatprep.subr.mxu0 0.0
      %1063 = vmatpush1.msra.mxu0 0.0
      %1064 = vmatprep.subr.mxu0 0.0
      %1065 = vmatpush1.msra.mxu0 0.0
      %1066 = vmatprep.subr.mxu0 0.0
      %1067 = vmatpush1.msra.mxu0 0.0
      %1068 = vmatprep.subr.mxu0 0.0
      %1069 = vmatpush1.msra.mxu0 0.0
      %1070 = vmatprep.subr.mxu0 0.0
      %1071 = vmatpush1.msra.mxu0 0.0
      %1072 = vmatprep.subr.mxu0 0.0
      %1073 = vmatpush1.msra.mxu0 0.0
      %1074 = vmatprep.subr.mxu0 0.0
      %1075 = vmatpush1.msra.mxu0 0.0
      %1076 = vmatprep.subr.mxu0 0.0
      %1077 = vmatpush1.msra.mxu0 0.0
      %1078 = vmatprep.subr.mxu0 0.0
      %1079 = vmatpush1.msra.mxu0 0.0
      %1080 = vmatprep.subr.mxu0 0.0
      %1081 = vmatpush1.msra.mxu0 0.0
      %1082 = vmatprep.subr.mxu0 0.0
      %1083 = vmatpush1.msra.mxu0 0.0
      %1084 = vmatprep.subr.mxu0 0.0
      %1085 = vmatpush1.msra.mxu0 0.0
      %1086 = vmatprep.subr.mxu0 0.0
      %1087 = vmatpush1.msra.mxu0 0.0
      %1088 = vmatprep.subr.mxu0 0.0
      %1089 = vmatpush1.msra.mxu0 0.0
      %1090 = vmatprep.subr.mxu0 0.0
      %1091 = vmatpush1.msra.mxu0 0.0
      %1092 = vmatprep.subr.mxu0 0.0
      %1093 = vmatpush1.msra.mxu0 0.0
      %1094 = vmatprep.subr.mxu0 0.0
      %1095 = vmatpush1.msra.mxu0 0.0
      %1096 = vmatprep.subr.mxu0 0.0
      %1097 = vmatpush1.msra.mxu0 0.0
      %1098 = vmatprep.subr.mxu0 0.0
      %1099 = vmatpush1.msra.mxu0 0.0
      %1100 = vmatprep.mubr.f32.mxu0 0.0
      %1101 = vmatmul.mubr.f32.gmra.mrb[0].mxu0 %v1028
      %v1102 = vpop.f32.mrb[0].mxu0
      %v1103 = vadd.f32 %v1015, %v1102
      %v1104 = vpop.f32.mrb[0].mxu0
      %1105 = vmatprep.mubr.f32.mxu0 0.0
      %1106 = vmatmul.mubr.f32.gmra.mrb[0].mxu0 %v1031
      %v1107 = vpop.f32.mrb[0].mxu0
      %v1108 = vadd.f32 %v1020, %v1107
      %v1109 = vpop.f32.mrb[0].mxu0
      %1110 = vmatprep.mubr.f32.mxu0 0.0
      %1111 = vmatmul.mubr.f32.gmra.mrb[0].mxu0 %v1034
      %v1112 = vpop.f32.mrb[0].mxu0
      %v1113 = vadd.f32 %v1025, %v1112
      %v1114 = vpop.f32.mrb[0].mxu0
      %1115 = vdwg.mxu0
      %v1116 = vmax.f32 %v1103, 0.0
      %v1117 = vmax.f32 %v1108, 0.0
      %v1118 = vmax.f32 %v1113, 0.0
      %v1119 = vand.u32 2147483647, %v1103
      %v1120 = vand.u32 2147483647, %v1108
      %v1121 = vand.u32 2147483647, %v1113
      %v1122 = vsub.f32 0.0, %v1119
      %v1123 = vsub.f32 0.0, %v1120
      %v1124 = vsub.f32 0.0, %v1121
      %v1125 = vmul.f32 %v1122, 1.442695
      %v1126 = vpow.pop %v1125
      %v1127 = vmul.f32 %v1123, 1.442695
      %v1128 = vpow.pop %v1127
      %v1129 = vmul.f32 %v1124, 1.442695
      %v1130 = vpow.pop %v1129
      %v1131 = vadd.f32 %v1126, 1.0
      %v1132 = vlog2.pop %v1131
      %v1133 = vmul.f32 %v1132, 0.6931472
      %v1134 = vmul.f32 -0.5, %v1126
      %v1135 = vadd.f32 %v1134, 1.0
      %v1136 = vmul.f32 %v1135, %v1126
      %v1137 = vand.u32 2147483647, %v1126
      %vm1138 = vcmp.lt.f32.partialorder %v1137, 0.0004427343
      %v1139 = vsel %vm1138, %v1136, %v1133
      %v1140 = vadd.f32 %v1128, 1.0
      %v1141 = vlog2.pop %v1140
      %v1142 = vmul.f32 %v1141, 0.6931472
      %v1143 = vmul.f32 -0.5, %v1128
      %v1144 = vadd.f32 %v1143, 1.0
      %v1145 = vmul.f32 %v1144, %v1128
      %v1146 = vand.u32 2147483647, %v1128
      %vm1147 = vcmp.lt.f32.partialorder %v1146, 0.0004427343
      %v1148 = vsel %vm1147, %v1145, %v1142
      %v1149 = vadd.f32 %v1130, 1.0
      %v1150 = vlog2.pop %v1149
      %v1151 = vmul.f32 %v1150, 0.6931472
      %v1152 = vmul.f32 -0.5, %v1130
      %v1153 = vadd.f32 %v1152, 1.0
      %v1154 = vmul.f32 %v1153, %v1130
      %v1155 = vand.u32 2147483647, %v1130
      %vm1156 = vcmp.lt.f32.partialorder %v1155, 0.0004427343
      %v1157 = vsel %vm1156, %v1154, %v1151
      %v1158 = vadd.f32 %v1116, %v1139
      %v1159 = vadd.f32 %v1117, %v1148
      %v1160 = vadd.f32 %v1118, %v1157
      %s1161 = scalar_lea.vmem %s2, 96
      %v1162 = vld [vmem:[%s1161] sm:$0xff]
      %v1163 = vld [vmem:[%s1161 + $0x8] sm:$0xff]
      %v1164 = vld [vmem:[%s1161 + $0x10] sm:$0xff]
      %s1165 = scalar_lea.vmem %s3, 120
      %v1166 = vld [vmem:[%s1165] sm:$0xff]
      %v1167 = vld [vmem:[%s1165 + $0x8] sm:$0xff]
      %v1168 = vld [vmem:[%s1165 + $0x10] sm:$0xff]
      %1170 = vset.pattern.permute.xlu0 0
      %1171 = vperm.xlu0 %1170, %v1166
      %v1172 = vpop.permute.xlu0 %1171
      %1175 = vset.pattern.permute.xlu0 0
      %1176 = vperm.xlu0 %1175, %v1167
      %v1177 = vpop.permute.xlu0 %1176
      %1180 = vset.pattern.permute.xlu0 0
      %1181 = vperm.xlu0 %1180, %v1168
      %v1182 = vpop.permute.xlu0 %1181
      %v1185 = vsel %vm330, %v1162, 0
      %v1188 = vsel %vm330, %v1163, 0
      %v1191 = vsel %vm330, %v1164, 0
      %1193 = vmatprep.subr.mxu0 0.0
      %1194 = vmatpush1.msra.mxu0 %v1158
      %1195 = vmatprep.subr.mxu0 0.0
      %1196 = vmatpush1.msra.mxu0 %v1159
      %1197 = vmatprep.subr.mxu0 0.0
      %1198 = vmatpush1.msra.mxu0 %v1160
      %1199 = vmatprep.subr.mxu0 0.0
      %1200 = vmatpush1.msra.mxu0 0.0
      %1201 = vmatprep.subr.mxu0 0.0
      %1202 = vmatpush1.msra.mxu0 0.0
      %1203 = vmatprep.subr.mxu0 0.0
      %1204 = vmatpush1.msra.mxu0 0.0
      %1205 = vmatprep.subr.mxu0 0.0
      %1206 = vmatpush1.msra.mxu0 0.0
      %1207 = vmatprep.subr.mxu0 0.0
      %1208 = vmatpush1.msra.mxu0 0.0
      %1209 = vmatprep.subr.mxu0 0.0
      %1210 = vmatpush1.msra.mxu0 0.0
      %1211 = vmatprep.subr.mxu0 0.0
      %1212 = vmatpush1.msra.mxu0 0.0
      %1213 = vmatprep.subr.mxu0 0.0
      %1214 = vmatpush1.msra.mxu0 0.0
      %1215 = vmatprep.subr.mxu0 0.0
      %1216 = vmatpush1.msra.mxu0 0.0
      %1217 = vmatprep.subr.mxu0 0.0
      %1218 = vmatpush1.msra.mxu0 0.0
      %1219 = vmatprep.subr.mxu0 0.0
      %1220 = vmatpush1.msra.mxu0 0.0
      %1221 = vmatprep.subr.mxu0 0.0
      %1222 = vmatpush1.msra.mxu0 0.0
      %1223 = vmatprep.subr.mxu0 0.0
      %1224 = vmatpush1.msra.mxu0 0.0
      %1225 = vmatprep.subr.mxu0 0.0
      %1226 = vmatpush1.msra.mxu0 0.0
      %1227 = vmatprep.subr.mxu0 0.0
      %1228 = vmatpush1.msra.mxu0 0.0
      %1229 = vmatprep.subr.mxu0 0.0
      %1230 = vmatpush1.msra.mxu0 0.0
      %1231 = vmatprep.subr.mxu0 0.0
      %1232 = vmatpush1.msra.mxu0 0.0
      %1233 = vmatprep.subr.mxu0 0.0
      %1234 = vmatpush1.msra.mxu0 0.0
      %1235 = vmatprep.subr.mxu0 0.0
      %1236 = vmatpush1.msra.mxu0 0.0
      %1237 = vmatprep.subr.mxu0 0.0
      %1238 = vmatpush1.msra.mxu0 0.0
      %1239 = vmatprep.subr.mxu0 0.0
      %1240 = vmatpush1.msra.mxu0 0.0
      %1241 = vmatprep.subr.mxu0 0.0
      %1242 = vmatpush1.msra.mxu0 0.0
      %1243 = vmatprep.subr.mxu0 0.0
      %1244 = vmatpush1.msra.mxu0 0.0
      %1245 = vmatprep.subr.mxu0 0.0
      %1246 = vmatpush1.msra.mxu0 0.0
      %1247 = vmatprep.subr.mxu0 0.0
      %1248 = vmatpush1.msra.mxu0 0.0
      %1249 = vmatprep.subr.mxu0 0.0
      %1250 = vmatpush1.msra.mxu0 0.0
      %1251 = vmatprep.subr.mxu0 0.0
      %1252 = vmatpush1.msra.mxu0 0.0
      %1253 = vmatprep.subr.mxu0 0.0
      %1254 = vmatpush1.msra.mxu0 0.0
      %1255 = vmatprep.subr.mxu0 0.0
      %1256 = vmatpush1.msra.mxu0 0.0
      %1257 = vmatprep.mubr.f32.mxu0 0.0
      %1258 = vmatmul.mubr.f32.gmra.mrb[0].mxu0 %v1185
      %v1259 = vpop.f32.mrb[0].mxu0
      %v1260 = vadd.f32 %v1172, %v1259
      %v1261 = vpop.f32.mrb[0].mxu0
      %1262 = vmatprep.mubr.f32.mxu0 0.0
      %1263 = vmatmul.mubr.f32.gmra.mrb[0].mxu0 %v1188
      %v1264 = vpop.f32.mrb[0].mxu0
      %v1265 = vadd.f32 %v1177, %v1264
      %v1266 = vpop.f32.mrb[0].mxu0
      %1267 = vmatprep.mubr.f32.mxu0 0.0
      %1268 = vmatmul.mubr.f32.gmra.mrb[0].mxu0 %v1191
      %v1269 = vpop.f32.mrb[0].mxu0
      %v1270 = vadd.f32 %v1182, %v1269
      %v1271 = vpop.f32.mrb[0].mxu0
      %1272 = vdwg.mxu0
      %v1273 = vand.u32 2147483647, %v1260
      %vm1274 = vcmp.le.f32.partialorder %v1273, 0.7853982
      %vm1275 = vcmp.lt.s32.totalorder %v1260, 0
      %v1276 = vand.u32 %v1260, 2139095040
      %v1277 = vshrl.u32 %v1276, 23
      %v1278 = vsub.s32 %v1277, 127
      %v1279 = vand.u32 2147483647, %v1260
      %v1280 = vand.u32 %v1279, 8388607
      %v1281 = vor.u32 %v1280, 8388608
      %v1282 = vsub.s32 0, %v1281
      %v1283 = vadd.s32 %v1278, 1
      %vm1284 = vcmp.gt.s32.totalorder %v1283, 0
      %v1285 = vsel %vm1284, %v1283, 0
      %v1286 = vshrl.u32 %v1285, 5
      %v1287 = vand.u32 %v1285, 31
      %v1288 = vsub.s32 32, %v1287
      %v1289 = vshrl.u32 683565275, %v1288
      %v1290 = vshll.u32 683565275, %v1287
      %v1291 = vshrl.u32 2475754826, %v1288
      %v1292 = vor.u32 %v1290, %v1291
      %v1293 = vshll.u32 2475754826, %v1287
      %v1294 = vshrl.u32 2131351028, %v1288
      %v1295 = vor.u32 %v1293, %v1294
      %v1296 = vshll.u32 2131351028, %v1287
      %v1297 = vshrl.u32 2102212464, %v1288
      %v1298 = vor.u32 %v1296, %v1297
      %v1299 = vshll.u32 2102212464, %v1287
      %v1300 = vshrl.u32 920167782, %v1288
      %v1301 = vor.u32 %v1299, %v1300
      %v1302 = vshll.u32 920167782, %v1287
      %v1303 = vshrl.u32 1326507024, %v1288
      %v1304 = vor.u32 %v1302, %v1303
      %vm1305 = vcmp.lt.s32.totalorder %v1286, 1
      %vm1306 = vcmp.lt.s32.totalorder %v1286, 2
      %vm1307 = vcmp.lt.s32.totalorder %v1286, 3
      %vm1308 = vcmp.lt.s32.totalorder %v1286, 4
      %v1309 = vsel %vm1305, %v1289, %v1292
      %v1310 = vsel %vm1308, %v1298, 2102212464
      %v1311 = vsel %vm1307, %v1295, %v1310
      %v1312 = vsel %vm1306, %v1309, %v1311
      %v1313 = vsel %vm1305, %v1292, %v1295
      %v1314 = vsel %vm1308, %v1301, 920167782
      %v1315 = vsel %vm1307, %v1298, %v1314
      %v1316 = vsel %vm1306, %v1313, %v1315
      %v1317 = vsel %vm1305, %v1295, %v1298
      %v1318 = vsel %vm1308, %v1304, 1326507024
      %v1319 = vsel %vm1307, %v1301, %v1318
      %v1320 = vsel %vm1306, %v1317, %v1319
      %v1321 = vshll.u32 %v1281, 8
      %v1322 = vmul.u32.u64.compose %v1321, %v1320
      %v1323 = vextract.low.u32 %v1322
      %v1324 = vextract.high.u32 %v1322
      %v1325 = vmul.u32.u64.compose %v1321, %v1316
      %v1326 = vextract.low.u32 %v1325
      %v1327 = vextract.high.u32 %v1325
      %v1328 = vmul.u32 %v1321, %v1312
      %v1329 = vadd.s32 %v1324, %v1326
      %vm1330 = vc.u32 %v1324, %v1326
      %v1331 = vadd.s32 %v1327, 1
      %v1332 = vsel %vm1330, %v1331, %v1327
      %v1333 = vadd.s32 %v1328, %v1332
      %v1334 = vadd.s32 %v1333, 536870912
      %v1335 = vshrl.u32 %v1334, 30
      %v1336 = vshll.u32 %v1335, 30
      %v1337 = vsub.s32 %v1333, %v1336
      %vm1338 = vcmp.lt.s32.totalorder %v1337, 0
      %v1339 = vsub.s32 0, %v1337
      %v1340 = vsel %vm1338, %v1339, %v1337
      %v1341 = vclz %v1340
      %v1342 = vsub.s32 %v1341, 2
      %vm1343 = vcmp.gt.s32.totalorder 0, %v1342
      %v1344 = vsel %vm1343, 0, %v1342
      %v1345 = vsub.s32 32, %v1344
      %v1346 = vshll.u32 %v1337, %v1344
      %v1347 = vshrl.u32 %v1329, %v1345
      %v1348 = vor.u32 %v1346, %v1347
      %v1349 = vsub.s32 4294967266, %v1344
      %v1350 = vadd.s32 %v1349, 127
      %v1351 = vshll.u32 %v1350, 23
      %v1352 = vor.u32 4788187, %v1351
      %v1353 = vand.u32 2147483647, %v1352
      %v1355 = vcvt.s32.f32 %v1348
      %v1356 = vmul.f32 %v1355, %v1353
      %v1357 = vxor.u32 %v1356, 2147483648
      %v1358 = vsel %vm1275, %v1357, %v1356
      %v1359 = vsub.s32 4, %v1335
      %v1360 = vsel %vm1275, %v1359, %v1335
      %v1361 = vsel %vm1274, %v1260, %v1358
      %v1362 = vsel %vm1274, 0, %v1360
      %v1363 = vcosq.f32.pop %v1361
      %v1364 = vsinq.f32.pop %v1361
      %vm1365 = vweird.f32 %v1260
      %v1366 = vadd.s32 %v1362, 3
      %v1367 = vand.u32 %v1366, 3
      %vm1368 = vcmp.lt.s32.totalorder %v1367, 2
      %vm1369 = vcmp.eq.s32.totalorder %v1367, 0
      %v1370 = vxor.u32 %v1364, 2147483648
      %v1371 = vsel %vm1369, %v1363, %v1370
      %vm1372 = vcmp.eq.s32.totalorder %v1367, 2
      %v1373 = vxor.u32 %v1363, 2147483648
      %v1374 = vsel %vm1372, %v1373, %v1364
      %v1375 = vsel %vm1368, %v1371, %v1374
      %v1376 = vsel %vm1365, nan, %v1375
      %v1377 = vand.u32 2147483647, %v1265
      %vm1378 = vcmp.le.f32.partialorder %v1377, 0.7853982
      %vm1379 = vcmp.lt.s32.totalorder %v1265, 0
      %v1380 = vand.u32 %v1265, 2139095040
      %v1381 = vshrl.u32 %v1380, 23
      %v1382 = vsub.s32 %v1381, 127
      %v1383 = vand.u32 2147483647, %v1265
      %v1384 = vand.u32 %v1383, 8388607
      %v1385 = vor.u32 %v1384, 8388608
      %v1386 = vsub.s32 0, %v1385
      %v1387 = vadd.s32 %v1382, 1
      %vm1388 = vcmp.gt.s32.totalorder %v1387, 0
      %v1389 = vsel %vm1388, %v1387, 0
      %v1390 = vshrl.u32 %v1389, 5
      %v1391 = vand.u32 %v1389, 31
      %v1392 = vsub.s32 32, %v1391
      %v1393 = vshrl.u32 683565275, %v1392
      %v1394 = vshll.u32 683565275, %v1391
      %v1395 = vshrl.u32 2475754826, %v1392
      %v1396 = vor.u32 %v1394, %v1395
      %v1397 = vshll.u32 2475754826, %v1391
      %v1398 = vshrl.u32 2131351028, %v1392
      %v1399 = vor.u32 %v1397, %v1398
      %v1400 = vshll.u32 2131351028, %v1391
      %v1401 = vshrl.u32 2102212464, %v1392
      %v1402 = vor.u32 %v1400, %v1401
      %v1403 = vshll.u32 2102212464, %v1391
      %v1404 = vshrl.u32 920167782, %v1392
      %v1405 = vor.u32 %v1403, %v1404
      %v1406 = vshll.u32 920167782, %v1391
      %v1407 = vshrl.u32 1326507024, %v1392
      %v1408 = vor.u32 %v1406, %v1407
      %vm1409 = vcmp.lt.s32.totalorder %v1390, 1
      %vm1410 = vcmp.lt.s32.totalorder %v1390, 2
      %vm1411 = vcmp.lt.s32.totalorder %v1390, 3
      %vm1412 = vcmp.lt.s32.totalorder %v1390, 4
      %v1413 = vsel %vm1409, %v1393, %v1396
      %v1414 = vsel %vm1412, %v1402, 2102212464
      %v1415 = vsel %vm1411, %v1399, %v1414
      %v1416 = vsel %vm1410, %v1413, %v1415
      %v1417 = vsel %vm1409, %v1396, %v1399
      %v1418 = vsel %vm1412, %v1405, 920167782
      %v1419 = vsel %vm1411, %v1402, %v1418
      %v1420 = vsel %vm1410, %v1417, %v1419
      %v1421 = vsel %vm1409, %v1399, %v1402
      %v1422 = vsel %vm1412, %v1408, 1326507024
      %v1423 = vsel %vm1411, %v1405, %v1422
      %v1424 = vsel %vm1410, %v1421, %v1423
      %v1425 = vshll.u32 %v1385, 8
      %v1426 = vmul.u32.u64.compose %v1425, %v1424
      %v1427 = vextract.low.u32 %v1426
      %v1428 = vextract.high.u32 %v1426
      %v1429 = vmul.u32.u64.compose %v1425, %v1420
      %v1430 = vextract.low.u32 %v1429
      %v1431 = vextract.high.u32 %v1429
      %v1432 = vmul.u32 %v1425, %v1416
      %v1433 = vadd.s32 %v1428, %v1430
      %vm1434 = vc.u32 %v1428, %v1430
      %v1435 = vadd.s32 %v1431, 1
      %v1436 = vsel %vm1434, %v1435, %v1431
      %v1437 = vadd.s32 %v1432, %v1436
      %v1438 = vadd.s32 %v1437, 536870912
      %v1439 = vshrl.u32 %v1438, 30
      %v1440 = vshll.u32 %v1439, 30
      %v1441 = vsub.s32 %v1437, %v1440
      %vm1442 = vcmp.lt.s32.totalorder %v1441, 0
      %v1443 = vsub.s32 0, %v1441
      %v1444 = vsel %vm1442, %v1443, %v1441
      %v1445 = vclz %v1444
      %v1446 = vsub.s32 %v1445, 2
      %vm1447 = vcmp.gt.s32.totalorder 0, %v1446
      %v1448 = vsel %vm1447, 0, %v1446
      %v1449 = vsub.s32 32, %v1448
      %v1450 = vshll.u32 %v1441, %v1448
      %v1451 = vshrl.u32 %v1433, %v1449
      %v1452 = vor.u32 %v1450, %v1451
      %v1453 = vsub.s32 4294967266, %v1448
      %v1454 = vadd.s32 %v1453, 127
      %v1455 = vshll.u32 %v1454, 23
      %v1456 = vor.u32 4788187, %v1455
      %v1457 = vand.u32 2147483647, %v1456
      %v1459 = vcvt.s32.f32 %v1452
      %v1460 = vmul.f32 %v1459, %v1457
      %v1461 = vxor.u32 %v1460, 2147483648
      %v1462 = vsel %vm1379, %v1461, %v1460
      %v1463 = vsub.s32 4, %v1439
      %v1464 = vsel %vm1379, %v1463, %v1439
      %v1465 = vsel %vm1378, %v1265, %v1462
      %v1466 = vsel %vm1378, 0, %v1464
      %v1467 = vcosq.f32.pop %v1465
      %v1468 = vsinq.f32.pop %v1465
      %vm1469 = vweird.f32 %v1265
      %v1470 = vadd.s32 %v1466, 3
      %v1471 = vand.u32 %v1470, 3
      %vm1472 = vcmp.lt.s32.totalorder %v1471, 2
      %vm1473 = vcmp.eq.s32.totalorder %v1471, 0
      %v1474 = vxor.u32 %v1468, 2147483648
      %v1475 = vsel %vm1473, %v1467, %v1474
      %vm1476 = vcmp.eq.s32.totalorder %v1471, 2
      %v1477 = vxor.u32 %v1467, 2147483648
      %v1478 = vsel %vm1476, %v1477, %v1468
      %v1479 = vsel %vm1472, %v1475, %v1478
      %v1480 = vsel %vm1469, nan, %v1479
      %v1481 = vand.u32 2147483647, %v1270
      %vm1482 = vcmp.le.f32.partialorder %v1481, 0.7853982
      %vm1483 = vcmp.lt.s32.totalorder %v1270, 0
      %v1484 = vand.u32 %v1270, 2139095040
      %v1485 = vshrl.u32 %v1484, 23
      %v1486 = vsub.s32 %v1485, 127
      %v1487 = vand.u32 2147483647, %v1270
      %v1488 = vand.u32 %v1487, 8388607
      %v1489 = vor.u32 %v1488, 8388608
      %v1490 = vsub.s32 0, %v1489
      %v1491 = vadd.s32 %v1486, 1
      %vm1492 = vcmp.gt.s32.totalorder %v1491, 0
      %v1493 = vsel %vm1492, %v1491, 0
      %v1494 = vshrl.u32 %v1493, 5
      %v1495 = vand.u32 %v1493, 31
      %v1496 = vsub.s32 32, %v1495
      %v1497 = vshrl.u32 683565275, %v1496
      %v1498 = vshll.u32 683565275, %v1495
      %v1499 = vshrl.u32 2475754826, %v1496
      %v1500 = vor.u32 %v1498, %v1499
      %v1501 = vshll.u32 2475754826, %v1495
      %v1502 = vshrl.u32 2131351028, %v1496
      %v1503 = vor.u32 %v1501, %v1502
      %v1504 = vshll.u32 2131351028, %v1495
      %v1505 = vshrl.u32 2102212464, %v1496
      %v1506 = vor.u32 %v1504, %v1505
      %v1507 = vshll.u32 2102212464, %v1495
      %v1508 = vshrl.u32 920167782, %v1496
      %v1509 = vor.u32 %v1507, %v1508
      %v1510 = vshll.u32 920167782, %v1495
      %v1511 = vshrl.u32 1326507024, %v1496
      %v1512 = vor.u32 %v1510, %v1511
      %vm1513 = vcmp.lt.s32.totalorder %v1494, 1
      %vm1514 = vcmp.lt.s32.totalorder %v1494, 2
      %vm1515 = vcmp.lt.s32.totalorder %v1494, 3
      %vm1516 = vcmp.lt.s32.totalorder %v1494, 4
      %v1517 = vsel %vm1513, %v1497, %v1500
      %v1518 = vsel %vm1516, %v1506, 2102212464
      %v1519 = vsel %vm1515, %v1503, %v1518
      %v1520 = vsel %vm1514, %v1517, %v1519
      %v1521 = vsel %vm1513, %v1500, %v1503
      %v1522 = vsel %vm1516, %v1509, 920167782
      %v1523 = vsel %vm1515, %v1506, %v1522
      %v1524 = vsel %vm1514, %v1521, %v1523
      %v1525 = vsel %vm1513, %v1503, %v1506
      %v1526 = vsel %vm1516, %v1512, 1326507024
      %v1527 = vsel %vm1515, %v1509, %v1526
      %v1528 = vsel %vm1514, %v1525, %v1527
      %v1529 = vshll.u32 %v1489, 8
      %v1530 = vmul.u32.u64.compose %v1529, %v1528
      %v1531 = vextract.low.u32 %v1530
      %v1532 = vextract.high.u32 %v1530
      %v1533 = vmul.u32.u64.compose %v1529, %v1524
      %v1534 = vextract.low.u32 %v1533
      %v1535 = vextract.high.u32 %v1533
      %v1536 = vmul.u32 %v1529, %v1520
      %v1537 = vadd.s32 %v1532, %v1534
      %vm1538 = vc.u32 %v1532, %v1534
      %v1539 = vadd.s32 %v1535, 1
      %v1540 = vsel %vm1538, %v1539, %v1535
      %v1541 = vadd.s32 %v1536, %v1540
      %v1542 = vadd.s32 %v1541, 536870912
      %v1543 = vshrl.u32 %v1542, 30
      %v1544 = vshll.u32 %v1543, 30
      %v1545 = vsub.s32 %v1541, %v1544
      %vm1546 = vcmp.lt.s32.totalorder %v1545, 0
      %v1547 = vsub.s32 0, %v1545
      %v1548 = vsel %vm1546, %v1547, %v1545
      %v1549 = vclz %v1548
      %v1550 = vsub.s32 %v1549, 2
      %vm1551 = vcmp.gt.s32.totalorder 0, %v1550
      %v1552 = vsel %vm1551, 0, %v1550
      %v1553 = vsub.s32 32, %v1552
      %v1554 = vshll.u32 %v1545, %v1552
      %v1555 = vshrl.u32 %v1537, %v1553
      %v1556 = vor.u32 %v1554, %v1555
      %v1557 = vsub.s32 4294967266, %v1552
      %v1558 = vadd.s32 %v1557, 127
      %v1559 = vshll.u32 %v1558, 23
      %v1560 = vor.u32 4788187, %v1559
      %v1561 = vand.u32 2147483647, %v1560
      %v1563 = vcvt.s32.f32 %v1556
      %v1564 = vmul.f32 %v1563, %v1561
      %v1565 = vxor.u32 %v1564, 2147483648
      %v1566 = vsel %vm1483, %v1565, %v1564
      %v1567 = vsub.s32 4, %v1543
      %v1568 = vsel %vm1483, %v1567, %v1543
      %v1569 = vsel %vm1482, %v1270, %v1566
      %v1570 = vsel %vm1482, 0, %v1568
      %v1571 = vcosq.f32.pop %v1569
      %v1572 = vsinq.f32.pop %v1569
      %vm1573 = vweird.f32 %v1270
      %v1574 = vadd.s32 %v1570, 3
      %v1575 = vand.u32 %v1574, 3
      %vm1576 = vcmp.lt.s32.totalorder %v1575, 2
      %vm1577 = vcmp.eq.s32.totalorder %v1575, 0
      %v1578 = vxor.u32 %v1572, 2147483648
      %v1579 = vsel %vm1577, %v1571, %v1578
      %vm1580 = vcmp.eq.s32.totalorder %v1575, 2
      %v1581 = vxor.u32 %v1571, 2147483648
      %v1582 = vsel %vm1580, %v1581, %v1572
      %v1583 = vsel %vm1576, %v1579, %v1582
      %v1584 = vsel %vm1573, nan, %v1583
      %s1585 = scalar_lea.vmem %s2, 120
      %v1586 = vld [vmem:[%s1585] sm:$0xff]
      %v1587 = vld [vmem:[%s1585 + $0x8] sm:$0xff]
      %v1588 = vld [vmem:[%s1585 + $0x10] sm:$0xff]
      %s1589 = scalar_lea.vmem %s3, 144
      %v1590 = vld [vmem:[%s1589] sm:$0xff]
      %v1591 = vld [vmem:[%s1589 + $0x8] sm:$0xff]
      %v1592 = vld [vmem:[%s1589 + $0x10] sm:$0xff]
      %1594 = vset.pattern.permute.xlu0 0
      %1595 = vperm.xlu0 %1594, %v1590
      %v1596 = vpop.permute.xlu0 %1595
      %1599 = vset.pattern.permute.xlu0 0
      %1600 = vperm.xlu0 %1599, %v1591
      %v1601 = vpop.permute.xlu0 %1600
      %1604 = vset.pattern.permute.xlu0 0
      %1605 = vperm.xlu0 %1604, %v1592
      %v1606 = vpop.permute.xlu0 %1605
      %v1609 = vsel %vm330, %v1586, 0
      %v1612 = vsel %vm330, %v1587, 0
      %v1615 = vsel %vm330, %v1588, 0
      %1617 = vmatprep.subr.mxu0 0.0
      %1618 = vmatpush1.msra.mxu0 %v1376
      %1619 = vmatprep.subr.mxu0 0.0
      %1620 = vmatpush1.msra.mxu0 %v1480
      %1621 = vmatprep.subr.mxu0 0.0
      %1622 = vmatpush1.msra.mxu0 %v1584
      %1623 = vmatprep.subr.mxu0 0.0
      %1624 = vmatpush1.msra.mxu0 0.0
      %1625 = vmatprep.subr.mxu0 0.0
      %1626 = vmatpush1.msra.mxu0 0.0
      %1627 = vmatprep.subr.mxu0 0.0
      %1628 = vmatpush1.msra.mxu0 0.0
      %1629 = vmatprep.subr.mxu0 0.0
      %1630 = vmatpush1.msra.mxu0 0.0
      %1631 = vmatprep.subr.mxu0 0.0
      %1632 = vmatpush1.msra.mxu0 0.0
      %1633 = vmatprep.subr.mxu0 0.0
      %1634 = vmatpush1.msra.mxu0 0.0
      %1635 = vmatprep.subr.mxu0 0.0
      %1636 = vmatpush1.msra.mxu0 0.0
      %1637 = vmatprep.subr.mxu0 0.0
      %1638 = vmatpush1.msra.mxu0 0.0
      %1639 = vmatprep.subr.mxu0 0.0
      %1640 = vmatpush1.msra.mxu0 0.0
      %1641 = vmatprep.subr.mxu0 0.0
      %1642 = vmatpush1.msra.mxu0 0.0
      %1643 = vmatprep.subr.mxu0 0.0
      %1644 = vmatpush1.msra.mxu0 0.0
      %1645 = vmatprep.subr.mxu0 0.0
      %1646 = vmatpush1.msra.mxu0 0.0
      %1647 = vmatprep.subr.mxu0 0.0
      %1648 = vmatpush1.msra.mxu0 0.0
      %1649 = vmatprep.subr.mxu0 0.0
      %1650 = vmatpush1.msra.mxu0 0.0
      %1651 = vmatprep.subr.mxu0 0.0
      %1652 = vmatpush1.msra.mxu0 0.0
      %1653 = vmatprep.subr.mxu0 0.0
      %1654 = vmatpush1.msra.mxu0 0.0
      %1655 = vmatprep.subr.mxu0 0.0
      %1656 = vmatpush1.msra.mxu0 0.0
      %1657 = vmatprep.subr.mxu0 0.0
      %1658 = vmatpush1.msra.mxu0 0.0
      %1659 = vmatprep.subr.mxu0 0.0
      %1660 = vmatpush1.msra.mxu0 0.0
      %1661 = vmatprep.subr.mxu0 0.0
      %1662 = vmatpush1.msra.mxu0 0.0
      %1663 = vmatprep.subr.mxu0 0.0
      %1664 = vmatpush1.msra.mxu0 0.0
      %1665 = vmatprep.subr.mxu0 0.0
      %1666 = vmatpush1.msra.mxu0 0.0
      %1667 = vmatprep.subr.mxu0 0.0
      %1668 = vmatpush1.msra.mxu0 0.0
      %1669 = vmatprep.subr.mxu0 0.0
      %1670 = vmatpush1.msra.mxu0 0.0
      %1671 = vmatprep.subr.mxu0 0.0
      %1672 = vmatpush1.msra.mxu0 0.0
      %1673 = vmatprep.subr.mxu0 0.0
      %1674 = vmatpush1.msra.mxu0 0.0
      %1675 = vmatprep.subr.mxu0 0.0
      %1676 = vmatpush1.msra.mxu0 0.0
      %1677 = vmatprep.subr.mxu0 0.0
      %1678 = vmatpush1.msra.mxu0 0.0
      %1679 = vmatprep.subr.mxu0 0.0
      %1680 = vmatpush1.msra.mxu0 0.0
      %1681 = vmatprep.mubr.f32.mxu0 0.0
      %1682 = vmatmul.mubr.f32.gmra.mrb[0].mxu0 %v1609
      %v1683 = vpop.f32.mrb[0].mxu0
      %v1684 = vadd.f32 %v1596, %v1683
      %v1685 = vpop.f32.mrb[0].mxu0
      %1686 = vmatprep.mubr.f32.mxu0 0.0
      %1687 = vmatmul.mubr.f32.gmra.mrb[0].mxu0 %v1612
      %v1688 = vpop.f32.mrb[0].mxu0
      %v1689 = vadd.f32 %v1601, %v1688
      %v1690 = vpop.f32.mrb[0].mxu0
      %1691 = vmatprep.mubr.f32.mxu0 0.0
      %1692 = vmatmul.mubr.f32.gmra.mrb[0].mxu0 %v1615
      %v1693 = vpop.f32.mrb[0].mxu0
      %v1694 = vadd.f32 %v1606, %v1693
      %v1695 = vpop.f32.mrb[0].mxu0
      %1696 = vdwg.mxu0
      %v1697 = vmax.f32 %v1684, 0.0
      %v1698 = vmax.f32 %v1689, 0.0
      %v1699 = vmax.f32 %v1694, 0.0
      %v1700 = vand.u32 2147483647, %v1684
      %v1701 = vand.u32 2147483647, %v1689
      %v1702 = vand.u32 2147483647, %v1694
      %v1703 = vsub.f32 0.0, %v1700
      %v1704 = vsub.f32 0.0, %v1701
      %v1705 = vsub.f32 0.0, %v1702
      %v1706 = vmul.f32 %v1703, 1.442695
      %v1707 = vpow.pop %v1706
      %v1708 = vmul.f32 %v1704, 1.442695
      %v1709 = vpow.pop %v1708
      %v1710 = vmul.f32 %v1705, 1.442695
      %v1711 = vpow.pop %v1710
      %v1712 = vadd.f32 %v1707, 1.0
      %v1713 = vlog2.pop %v1712
      %v1714 = vmul.f32 %v1713, 0.6931472
      %v1715 = vmul.f32 -0.5, %v1707
      %v1716 = vadd.f32 %v1715, 1.0
      %v1717 = vmul.f32 %v1716, %v1707
      %v1718 = vand.u32 2147483647, %v1707
      %vm1719 = vcmp.lt.f32.partialorder %v1718, 0.0004427343
      %v1720 = vsel %vm1719, %v1717, %v1714
      %v1721 = vadd.f32 %v1709, 1.0
      %v1722 = vlog2.pop %v1721
      %v1723 = vmul.f32 %v1722, 0.6931472
      %v1724 = vmul.f32 -0.5, %v1709
      %v1725 = vadd.f32 %v1724, 1.0
      %v1726 = vmul.f32 %v1725, %v1709
      %v1727 = vand.u32 2147483647, %v1709
      %vm1728 = vcmp.lt.f32.partialorder %v1727, 0.0004427343
      %v1729 = vsel %vm1728, %v1726, %v1723
      %v1730 = vadd.f32 %v1711, 1.0
      %v1731 = vlog2.pop %v1730
      %v1732 = vmul.f32 %v1731, 0.6931472
      %v1733 = vmul.f32 -0.5, %v1711
      %v1734 = vadd.f32 %v1733, 1.0
      %v1735 = vmul.f32 %v1734, %v1711
      %v1736 = vand.u32 2147483647, %v1711
      %vm1737 = vcmp.lt.f32.partialorder %v1736, 0.0004427343
      %v1738 = vsel %vm1737, %v1735, %v1732
      %v1739 = vadd.f32 %v1697, %v1720
      %v1740 = vadd.f32 %v1698, %v1729
      %v1741 = vadd.f32 %v1699, %v1738
      %s1742 = scalar_lea.vmem %s2, 144
      %v1743 = vld [vmem:[%s1742] sm:$0xff]
      %v1744 = vld [vmem:[%s1742 + $0x8] sm:$0xff]
      %v1745 = vld [vmem:[%s1742 + $0x10] sm:$0xff]
      %s1746 = scalar_lea.vmem %s3, 168
      %v1747 = vld [vmem:[%s1746] sm:$0xff]
      %v1748 = vld [vmem:[%s1746 + $0x8] sm:$0xff]
      %v1749 = vld [vmem:[%s1746 + $0x10] sm:$0xff]
      %1751 = vset.pattern.permute.xlu0 0
      %1752 = vperm.xlu0 %1751, %v1747
      %v1753 = vpop.permute.xlu0 %1752
      %1756 = vset.pattern.permute.xlu0 0
      %1757 = vperm.xlu0 %1756, %v1748
      %v1758 = vpop.permute.xlu0 %1757
      %1761 = vset.pattern.permute.xlu0 0
      %1762 = vperm.xlu0 %1761, %v1749
      %v1763 = vpop.permute.xlu0 %1762
      %v1766 = vsel %vm330, %v1743, 0
      %v1769 = vsel %vm330, %v1744, 0
      %v1772 = vsel %vm330, %v1745, 0
      %1774 = vmatprep.subr.mxu0 0.0
      %1775 = vmatpush1.msra.mxu0 %v1739
      %1776 = vmatprep.subr.mxu0 0.0
      %1777 = vmatpush1.msra.mxu0 %v1740
      %1778 = vmatprep.subr.mxu0 0.0
      %1779 = vmatpush1.msra.mxu0 %v1741
      %1780 = vmatprep.subr.mxu0 0.0
      %1781 = vmatpush1.msra.mxu0 0.0
      %1782 = vmatprep.subr.mxu0 0.0
      %1783 = vmatpush1.msra.mxu0 0.0
      %1784 = vmatprep.subr.mxu0 0.0
      %1785 = vmatpush1.msra.mxu0 0.0
      %1786 = vmatprep.subr.mxu0 0.0
      %1787 = vmatpush1.msra.mxu0 0.0
      %1788 = vmatprep.subr.mxu0 0.0
      %1789 = vmatpush1.msra.mxu0 0.0
      %1790 = vmatprep.subr.mxu0 0.0
      %1791 = vmatpush1.msra.mxu0 0.0
      %1792 = vmatprep.subr.mxu0 0.0
      %1793 = vmatpush1.msra.mxu0 0.0
      %1794 = vmatprep.subr.mxu0 0.0
      %1795 = vmatpush1.msra.mxu0 0.0
      %1796 = vmatprep.subr.mxu0 0.0
      %1797 = vmatpush1.msra.mxu0 0.0
      %1798 = vmatprep.subr.mxu0 0.0
      %1799 = vmatpush1.msra.mxu0 0.0
      %1800 = vmatprep.subr.mxu0 0.0
      %1801 = vmatpush1.msra.mxu0 0.0
      %1802 = vmatprep.subr.mxu0 0.0
      %1803 = vmatpush1.msra.mxu0 0.0
      %1804 = vmatprep.subr.mxu0 0.0
      %1805 = vmatpush1.msra.mxu0 0.0
      %1806 = vmatprep.subr.mxu0 0.0
      %1807 = vmatpush1.msra.mxu0 0.0
      %1808 = vmatprep.subr.mxu0 0.0
      %1809 = vmatpush1.msra.mxu0 0.0
      %1810 = vmatprep.subr.mxu0 0.0
      %1811 = vmatpush1.msra.mxu0 0.0
      %1812 = vmatprep.subr.mxu0 0.0
      %1813 = vmatpush1.msra.mxu0 0.0
      %1814 = vmatprep.subr.mxu0 0.0
      %1815 = vmatpush1.msra.mxu0 0.0
      %1816 = vmatprep.subr.mxu0 0.0
      %1817 = vmatpush1.msra.mxu0 0.0
      %1818 = vmatprep.subr.mxu0 0.0
      %1819 = vmatpush1.msra.mxu0 0.0
      %1820 = vmatprep.subr.mxu0 0.0
      %1821 = vmatpush1.msra.mxu0 0.0
      %1822 = vmatprep.subr.mxu0 0.0
      %1823 = vmatpush1.msra.mxu0 0.0
      %1824 = vmatprep.subr.mxu0 0.0
      %1825 = vmatpush1.msra.mxu0 0.0
      %1826 = vmatprep.subr.mxu0 0.0
      %1827 = vmatpush1.msra.mxu0 0.0
      %1828 = vmatprep.subr.mxu0 0.0
      %1829 = vmatpush1.msra.mxu0 0.0
      %1830 = vmatprep.subr.mxu0 0.0
      %1831 = vmatpush1.msra.mxu0 0.0
      %1832 = vmatprep.subr.mxu0 0.0
      %1833 = vmatpush1.msra.mxu0 0.0
      %1834 = vmatprep.subr.mxu0 0.0
      %1835 = vmatpush1.msra.mxu0 0.0
      %1836 = vmatprep.subr.mxu0 0.0
      %1837 = vmatpush1.msra.mxu0 0.0
      %1838 = vmatprep.mubr.f32.mxu0 0.0
      %1839 = vmatmul.mubr.f32.gmra.mrb[0].mxu0 %v1766
      %v1840 = vpop.f32.mrb[0].mxu0
      %v1841 = vadd.f32 %v1753, %v1840
      %v1842 = vpop.f32.mrb[0].mxu0
      %1843 = vmatprep.mubr.f32.mxu0 0.0
      %1844 = vmatmul.mubr.f32.gmra.mrb[0].mxu0 %v1769
      %v1845 = vpop.f32.mrb[0].mxu0
      %v1846 = vadd.f32 %v1758, %v1845
      %v1847 = vpop.f32.mrb[0].mxu0
      %1848 = vmatprep.mubr.f32.mxu0 0.0
      %1849 = vmatmul.mubr.f32.gmra.mrb[0].mxu0 %v1772
      %v1850 = vpop.f32.mrb[0].mxu0
      %v1851 = vadd.f32 %v1763, %v1850
      %v1852 = vpop.f32.mrb[0].mxu0
      %1853 = vdwg.mxu0
      %v1854 = vand.u32 2147483647, %v1841
      %vm1855 = vcmp.le.f32.partialorder %v1854, 0.7853982
      %vm1856 = vcmp.lt.s32.totalorder %v1841, 0
      %v1857 = vand.u32 %v1841, 2139095040
      %v1858 = vshrl.u32 %v1857, 23
      %v1859 = vsub.s32 %v1858, 127
      %v1860 = vand.u32 2147483647, %v1841
      %v1861 = vand.u32 %v1860, 8388607
      %v1862 = vor.u32 %v1861, 8388608
      %v1863 = vsub.s32 0, %v1862
      %v1864 = vadd.s32 %v1859, 1
      %vm1865 = vcmp.gt.s32.totalorder %v1864, 0
      %v1866 = vsel %vm1865, %v1864, 0
      %v1867 = vshrl.u32 %v1866, 5
      %v1868 = vand.u32 %v1866, 31
      %v1869 = vsub.s32 32, %v1868
      %v1870 = vshrl.u32 683565275, %v1869
      %v1871 = vshll.u32 683565275, %v1868
      %v1872 = vshrl.u32 2475754826, %v1869
      %v1873 = vor.u32 %v1871, %v1872
      %v1874 = vshll.u32 2475754826, %v1868
      %v1875 = vshrl.u32 2131351028, %v1869
      %v1876 = vor.u32 %v1874, %v1875
      %v1877 = vshll.u32 2131351028, %v1868
      %v1878 = vshrl.u32 2102212464, %v1869
      %v1879 = vor.u32 %v1877, %v1878
      %v1880 = vshll.u32 2102212464, %v1868
      %v1881 = vshrl.u32 920167782, %v1869
      %v1882 = vor.u32 %v1880, %v1881
      %v1883 = vshll.u32 920167782, %v1868
      %v1884 = vshrl.u32 1326507024, %v1869
      %v1885 = vor.u32 %v1883, %v1884
      %vm1886 = vcmp.lt.s32.totalorder %v1867, 1
      %vm1887 = vcmp.lt.s32.totalorder %v1867, 2
      %vm1888 = vcmp.lt.s32.totalorder %v1867, 3
      %vm1889 = vcmp.lt.s32.totalorder %v1867, 4
      %v1890 = vsel %vm1886, %v1870, %v1873
      %v1891 = vsel %vm1889, %v1879, 2102212464
      %v1892 = vsel %vm1888, %v1876, %v1891
      %v1893 = vsel %vm1887, %v1890, %v1892
      %v1894 = vsel %vm1886, %v1873, %v1876
      %v1895 = vsel %vm1889, %v1882, 920167782
      %v1896 = vsel %vm1888, %v1879, %v1895
      %v1897 = vsel %vm1887, %v1894, %v1896
      %v1898 = vsel %vm1886, %v1876, %v1879
      %v1899 = vsel %vm1889, %v1885, 1326507024
      %v1900 = vsel %vm1888, %v1882, %v1899
      %v1901 = vsel %vm1887, %v1898, %v1900
      %v1902 = vshll.u32 %v1862, 8
      %v1903 = vmul.u32.u64.compose %v1902, %v1901
      %v1904 = vextract.low.u32 %v1903
      %v1905 = vextract.high.u32 %v1903
      %v1906 = vmul.u32.u64.compose %v1902, %v1897
      %v1907 = vextract.low.u32 %v1906
      %v1908 = vextract.high.u32 %v1906
      %v1909 = vmul.u32 %v1902, %v1893
      %v1910 = vadd.s32 %v1905, %v1907
      %vm1911 = vc.u32 %v1905, %v1907
      %v1912 = vadd.s32 %v1908, 1
      %v1913 = vsel %vm1911, %v1912, %v1908
      %v1914 = vadd.s32 %v1909, %v1913
      %v1915 = vadd.s32 %v1914, 536870912
      %v1916 = vshrl.u32 %v1915, 30
      %v1917 = vshll.u32 %v1916, 30
      %v1918 = vsub.s32 %v1914, %v1917
      %vm1919 = vcmp.lt.s32.totalorder %v1918, 0
      %v1920 = vsub.s32 0, %v1918
      %v1921 = vsel %vm1919, %v1920, %v1918
      %v1922 = vclz %v1921
      %v1923 = vsub.s32 %v1922, 2
      %vm1924 = vcmp.gt.s32.totalorder 0, %v1923
      %v1925 = vsel %vm1924, 0, %v1923
      %v1926 = vsub.s32 32, %v1925
      %v1927 = vshll.u32 %v1918, %v1925
      %v1928 = vshrl.u32 %v1910, %v1926
      %v1929 = vor.u32 %v1927, %v1928
      %v1930 = vsub.s32 4294967266, %v1925
      %v1931 = vadd.s32 %v1930, 127
      %v1932 = vshll.u32 %v1931, 23
      %v1933 = vor.u32 4788187, %v1932
      %v1934 = vand.u32 2147483647, %v1933
      %v1936 = vcvt.s32.f32 %v1929
      %v1937 = vmul.f32 %v1936, %v1934
      %v1938 = vxor.u32 %v1937, 2147483648
      %v1939 = vsel %vm1856, %v1938, %v1937
      %v1940 = vsub.s32 4, %v1916
      %v1941 = vsel %vm1856, %v1940, %v1916
      %v1942 = vsel %vm1855, %v1841, %v1939
      %v1943 = vsel %vm1855, 0, %v1941
      %v1944 = vcosq.f32.pop %v1942
      %v1945 = vsinq.f32.pop %v1942
      %vm1946 = vweird.f32 %v1841
      %v1947 = vadd.s32 %v1943, 3
      %v1948 = vand.u32 %v1947, 3
      %vm1949 = vcmp.lt.s32.totalorder %v1948, 2
      %vm1950 = vcmp.eq.s32.totalorder %v1948, 0
      %v1951 = vxor.u32 %v1945, 2147483648
      %v1952 = vsel %vm1950, %v1944, %v1951
      %vm1953 = vcmp.eq.s32.totalorder %v1948, 2
      %v1954 = vxor.u32 %v1944, 2147483648
      %v1955 = vsel %vm1953, %v1954, %v1945
      %v1956 = vsel %vm1949, %v1952, %v1955
      %v1957 = vsel %vm1946, nan, %v1956
      %v1958 = vand.u32 2147483647, %v1846
      %vm1959 = vcmp.le.f32.partialorder %v1958, 0.7853982
      %vm1960 = vcmp.lt.s32.totalorder %v1846, 0
      %v1961 = vand.u32 %v1846, 2139095040
      %v1962 = vshrl.u32 %v1961, 23
      %v1963 = vsub.s32 %v1962, 127
      %v1964 = vand.u32 2147483647, %v1846
      %v1965 = vand.u32 %v1964, 8388607
      %v1966 = vor.u32 %v1965, 8388608
      %v1967 = vsub.s32 0, %v1966
      %v1968 = vadd.s32 %v1963, 1
      %vm1969 = vcmp.gt.s32.totalorder %v1968, 0
      %v1970 = vsel %vm1969, %v1968, 0
      %v1971 = vshrl.u32 %v1970, 5
      %v1972 = vand.u32 %v1970, 31
      %v1973 = vsub.s32 32, %v1972
      %v1974 = vshrl.u32 683565275, %v1973
      %v1975 = vshll.u32 683565275, %v1972
      %v1976 = vshrl.u32 2475754826, %v1973
      %v1977 = vor.u32 %v1975, %v1976
      %v1978 = vshll.u32 2475754826, %v1972
      %v1979 = vshrl.u32 2131351028, %v1973
      %v1980 = vor.u32 %v1978, %v1979
      %v1981 = vshll.u32 2131351028, %v1972
      %v1982 = vshrl.u32 2102212464, %v1973
      %v1983 = vor.u32 %v1981, %v1982
      %v1984 = vshll.u32 2102212464, %v1972
      %v1985 = vshrl.u32 920167782, %v1973
      %v1986 = vor.u32 %v1984, %v1985
      %v1987 = vshll.u32 920167782, %v1972
      %v1988 = vshrl.u32 1326507024, %v1973
      %v1989 = vor.u32 %v1987, %v1988
      %vm1990 = vcmp.lt.s32.totalorder %v1971, 1
      %vm1991 = vcmp.lt.s32.totalorder %v1971, 2
      %vm1992 = vcmp.lt.s32.totalorder %v1971, 3
      %vm1993 = vcmp.lt.s32.totalorder %v1971, 4
      %v1994 = vsel %vm1990, %v1974, %v1977
      %v1995 = vsel %vm1993, %v1983, 2102212464
      %v1996 = vsel %vm1992, %v1980, %v1995
      %v1997 = vsel %vm1991, %v1994, %v1996
      %v1998 = vsel %vm1990, %v1977, %v1980
      %v1999 = vsel %vm1993, %v1986, 920167782
      %v2000 = vsel %vm1992, %v1983, %v1999
      %v2001 = vsel %vm1991, %v1998, %v2000
      %v2002 = vsel %vm1990, %v1980, %v1983
      %v2003 = vsel %vm1993, %v1989, 1326507024
      %v2004 = vsel %vm1992, %v1986, %v2003
      %v2005 = vsel %vm1991, %v2002, %v2004
      %v2006 = vshll.u32 %v1966, 8
      %v2007 = vmul.u32.u64.compose %v2006, %v2005
      %v2008 = vextract.low.u32 %v2007
      %v2009 = vextract.high.u32 %v2007
      %v2010 = vmul.u32.u64.compose %v2006, %v2001
      %v2011 = vextract.low.u32 %v2010
      %v2012 = vextract.high.u32 %v2010
      %v2013 = vmul.u32 %v2006, %v1997
      %v2014 = vadd.s32 %v2009, %v2011
      %vm2015 = vc.u32 %v2009, %v2011
      %v2016 = vadd.s32 %v2012, 1
      %v2017 = vsel %vm2015, %v2016, %v2012
      %v2018 = vadd.s32 %v2013, %v2017
      %v2019 = vadd.s32 %v2018, 536870912
      %v2020 = vshrl.u32 %v2019, 30
      %v2021 = vshll.u32 %v2020, 30
      %v2022 = vsub.s32 %v2018, %v2021
      %vm2023 = vcmp.lt.s32.totalorder %v2022, 0
      %v2024 = vsub.s32 0, %v2022
      %v2025 = vsel %vm2023, %v2024, %v2022
      %v2026 = vclz %v2025
      %v2027 = vsub.s32 %v2026, 2
      %vm2028 = vcmp.gt.s32.totalorder 0, %v2027
      %v2029 = vsel %vm2028, 0, %v2027
      %v2030 = vsub.s32 32, %v2029
      %v2031 = vshll.u32 %v2022, %v2029
      %v2032 = vshrl.u32 %v2014, %v2030
      %v2033 = vor.u32 %v2031, %v2032
      %v2034 = vsub.s32 4294967266, %v2029
      %v2035 = vadd.s32 %v2034, 127
      %v2036 = vshll.u32 %v2035, 23
      %v2037 = vor.u32 4788187, %v2036
      %v2038 = vand.u32 2147483647, %v2037
      %v2040 = vcvt.s32.f32 %v2033
      %v2041 = vmul.f32 %v2040, %v2038
      %v2042 = vxor.u32 %v2041, 2147483648
      %v2043 = vsel %vm1960, %v2042, %v2041
      %v2044 = vsub.s32 4, %v2020
      %v2045 = vsel %vm1960, %v2044, %v2020
      %v2046 = vsel %vm1959, %v1846, %v2043
      %v2047 = vsel %vm1959, 0, %v2045
      %v2048 = vcosq.f32.pop %v2046
      %v2049 = vsinq.f32.pop %v2046
      %vm2050 = vweird.f32 %v1846
      %v2051 = vadd.s32 %v2047, 3
      %v2052 = vand.u32 %v2051, 3
      %vm2053 = vcmp.lt.s32.totalorder %v2052, 2
      %vm2054 = vcmp.eq.s32.totalorder %v2052, 0
      %v2055 = vxor.u32 %v2049, 2147483648
      %v2056 = vsel %vm2054, %v2048, %v2055
      %vm2057 = vcmp.eq.s32.totalorder %v2052, 2
      %v2058 = vxor.u32 %v2048, 2147483648
      %v2059 = vsel %vm2057, %v2058, %v2049
      %v2060 = vsel %vm2053, %v2056, %v2059
      %v2061 = vsel %vm2050, nan, %v2060
      %v2062 = vand.u32 2147483647, %v1851
      %vm2063 = vcmp.le.f32.partialorder %v2062, 0.7853982
      %vm2064 = vcmp.lt.s32.totalorder %v1851, 0
      %v2065 = vand.u32 %v1851, 2139095040
      %v2066 = vshrl.u32 %v2065, 23
      %v2067 = vsub.s32 %v2066, 127
      %v2068 = vand.u32 2147483647, %v1851
      %v2069 = vand.u32 %v2068, 8388607
      %v2070 = vor.u32 %v2069, 8388608
      %v2071 = vsub.s32 0, %v2070
      %v2072 = vadd.s32 %v2067, 1
      %vm2073 = vcmp.gt.s32.totalorder %v2072, 0
      %v2074 = vsel %vm2073, %v2072, 0
      %v2075 = vshrl.u32 %v2074, 5
      %v2076 = vand.u32 %v2074, 31
      %v2077 = vsub.s32 32, %v2076
      %v2078 = vshrl.u32 683565275, %v2077
      %v2079 = vshll.u32 683565275, %v2076
      %v2080 = vshrl.u32 2475754826, %v2077
      %v2081 = vor.u32 %v2079, %v2080
      %v2082 = vshll.u32 2475754826, %v2076
      %v2083 = vshrl.u32 2131351028, %v2077
      %v2084 = vor.u32 %v2082, %v2083
      %v2085 = vshll.u32 2131351028, %v2076
      %v2086 = vshrl.u32 2102212464, %v2077
      %v2087 = vor.u32 %v2085, %v2086
      %v2088 = vshll.u32 2102212464, %v2076
      %v2089 = vshrl.u32 920167782, %v2077
      %v2090 = vor.u32 %v2088, %v2089
      %v2091 = vshll.u32 920167782, %v2076
      %v2092 = vshrl.u32 1326507024, %v2077
      %v2093 = vor.u32 %v2091, %v2092
      %vm2094 = vcmp.lt.s32.totalorder %v2075, 1
      %vm2095 = vcmp.lt.s32.totalorder %v2075, 2
      %vm2096 = vcmp.lt.s32.totalorder %v2075, 3
      %vm2097 = vcmp.lt.s32.totalorder %v2075, 4
      %v2098 = vsel %vm2094, %v2078, %v2081
      %v2099 = vsel %vm2097, %v2087, 2102212464
      %v2100 = vsel %vm2096, %v2084, %v2099
      %v2101 = vsel %vm2095, %v2098, %v2100
      %v2102 = vsel %vm2094, %v2081, %v2084
      %v2103 = vsel %vm2097, %v2090, 920167782
      %v2104 = vsel %vm2096, %v2087, %v2103
      %v2105 = vsel %vm2095, %v2102, %v2104
      %v2106 = vsel %vm2094, %v2084, %v2087
      %v2107 = vsel %vm2097, %v2093, 1326507024
      %v2108 = vsel %vm2096, %v2090, %v2107
      %v2109 = vsel %vm2095, %v2106, %v2108
      %v2110 = vshll.u32 %v2070, 8
      %v2111 = vmul.u32.u64.compose %v2110, %v2109
      %v2112 = vextract.low.u32 %v2111
      %v2113 = vextract.high.u32 %v2111
      %v2114 = vmul.u32.u64.compose %v2110, %v2105
      %v2115 = vextract.low.u32 %v2114
      %v2116 = vextract.high.u32 %v2114
      %v2117 = vmul.u32 %v2110, %v2101
      %v2118 = vadd.s32 %v2113, %v2115
      %vm2119 = vc.u32 %v2113, %v2115
      %v2120 = vadd.s32 %v2116, 1
      %v2121 = vsel %vm2119, %v2120, %v2116
      %v2122 = vadd.s32 %v2117, %v2121
      %v2123 = vadd.s32 %v2122, 536870912
      %v2124 = vshrl.u32 %v2123, 30
      %v2125 = vshll.u32 %v2124, 30
      %v2126 = vsub.s32 %v2122, %v2125
      %vm2127 = vcmp.lt.s32.totalorder %v2126, 0
      %v2128 = vsub.s32 0, %v2126
      %v2129 = vsel %vm2127, %v2128, %v2126
      %v2130 = vclz %v2129
      %v2131 = vsub.s32 %v2130, 2
      %vm2132 = vcmp.gt.s32.totalorder 0, %v2131
      %v2133 = vsel %vm2132, 0, %v2131
      %v2134 = vsub.s32 32, %v2133
      %v2135 = vshll.u32 %v2126, %v2133
      %v2136 = vshrl.u32 %v2118, %v2134
      %v2137 = vor.u32 %v2135, %v2136
      %v2138 = vsub.s32 4294967266, %v2133
      %v2139 = vadd.s32 %v2138, 127
      %v2140 = vshll.u32 %v2139, 23
      %v2141 = vor.u32 4788187, %v2140
      %v2142 = vand.u32 2147483647, %v2141
      %v2144 = vcvt.s32.f32 %v2137
      %v2145 = vmul.f32 %v2144, %v2142
      %v2146 = vxor.u32 %v2145, 2147483648
      %v2147 = vsel %vm2064, %v2146, %v2145
      %v2148 = vsub.s32 4, %v2124
      %v2149 = vsel %vm2064, %v2148, %v2124
      %v2150 = vsel %vm2063, %v1851, %v2147
      %v2151 = vsel %vm2063, 0, %v2149
      %v2152 = vcosq.f32.pop %v2150
      %v2153 = vsinq.f32.pop %v2150
      %vm2154 = vweird.f32 %v1851
      %v2155 = vadd.s32 %v2151, 3
      %v2156 = vand.u32 %v2155, 3
      %vm2157 = vcmp.lt.s32.totalorder %v2156, 2
      %vm2158 = vcmp.eq.s32.totalorder %v2156, 0
      %v2159 = vxor.u32 %v2153, 2147483648
      %v2160 = vsel %vm2158, %v2152, %v2159
      %vm2161 = vcmp.eq.s32.totalorder %v2156, 2
      %v2162 = vxor.u32 %v2152, 2147483648
      %v2163 = vsel %vm2161, %v2162, %v2153
      %v2164 = vsel %vm2157, %v2160, %v2163
      %v2165 = vsel %vm2154, nan, %v2164
      %s2166 = scalar_lea.vmem %s2, 168
      %v2167 = vld [vmem:[%s2166] sm:$0xff]
      %v2168 = vld [vmem:[%s2166 + $0x8] sm:$0xff]
      %v2169 = vld [vmem:[%s2166 + $0x10] sm:$0xff]
      %s2170 = scalar_lea.vmem %s3, 192
      %v2171 = vld [vmem:[%s2170] sm:$0xff]
      %v2172 = vld [vmem:[%s2170 + $0x8] sm:$0xff]
      %v2173 = vld [vmem:[%s2170 + $0x10] sm:$0xff]
      %2175 = vset.pattern.permute.xlu0 0
      %2176 = vperm.xlu0 %2175, %v2171
      %v2177 = vpop.permute.xlu0 %2176
      %2180 = vset.pattern.permute.xlu0 0
      %2181 = vperm.xlu0 %2180, %v2172
      %v2182 = vpop.permute.xlu0 %2181
      %2184 = vset.pattern.permute.xlu0 0
      %2185 = vperm.xlu0 %2184, %v2173
      %v2186 = vpop.permute.xlu0 %2185
      %v2188 = vsel %vm330, %v2167, 0
      %v2191 = vsel %vm330, %v2168, 0
      %v2194 = vsel %vm330, %v2169, 0
      %2196 = vmatprep.subr.mxu0 0.0
      %2197 = vmatpush1.msra.mxu0 %v1957
      %2198 = vmatprep.subr.mxu0 0.0
      %2199 = vmatpush1.msra.mxu0 %v2061
      %2200 = vmatprep.subr.mxu0 0.0
      %2201 = vmatpush1.msra.mxu0 %v2165
      %2202 = vmatprep.subr.mxu0 0.0
      %2203 = vmatpush1.msra.mxu0 0.0
      %2204 = vmatprep.subr.mxu0 0.0
      %2205 = vmatpush1.msra.mxu0 0.0
      %2206 = vmatprep.subr.mxu0 0.0
      %2207 = vmatpush1.msra.mxu0 0.0
      %2208 = vmatprep.subr.mxu0 0.0
      %2209 = vmatpush1.msra.mxu0 0.0
      %2210 = vmatprep.subr.mxu0 0.0
      %2211 = vmatpush1.msra.mxu0 0.0
      %2212 = vmatprep.subr.mxu0 0.0
      %2213 = vmatpush1.msra.mxu0 0.0
      %2214 = vmatprep.subr.mxu0 0.0
      %2215 = vmatpush1.msra.mxu0 0.0
      %2216 = vmatprep.subr.mxu0 0.0
      %2217 = vmatpush1.msra.mxu0 0.0
      %2218 = vmatprep.subr.mxu0 0.0
      %2219 = vmatpush1.msra.mxu0 0.0
      %2220 = vmatprep.subr.mxu0 0.0
      %2221 = vmatpush1.msra.mxu0 0.0
      %2222 = vmatprep.subr.mxu0 0.0
      %2223 = vmatpush1.msra.mxu0 0.0
      %2224 = vmatprep.subr.mxu0 0.0
      %2225 = vmatpush1.msra.mxu0 0.0
      %2226 = vmatprep.subr.mxu0 0.0
      %2227 = vmatpush1.msra.mxu0 0.0
      %2228 = vmatprep.subr.mxu0 0.0
      %2229 = vmatpush1.msra.mxu0 0.0
      %2230 = vmatprep.subr.mxu0 0.0
      %2231 = vmatpush1.msra.mxu0 0.0
      %2232 = vmatprep.subr.mxu0 0.0
      %2233 = vmatpush1.msra.mxu0 0.0
      %2234 = vmatprep.subr.mxu0 0.0
      %2235 = vmatpush1.msra.mxu0 0.0
      %2236 = vmatprep.subr.mxu0 0.0
      %2237 = vmatpush1.msra.mxu0 0.0
      %2238 = vmatprep.subr.mxu0 0.0
      %2239 = vmatpush1.msra.mxu0 0.0
      %2240 = vmatprep.subr.mxu0 0.0
      %2241 = vmatpush1.msra.mxu0 0.0
      %2242 = vmatprep.subr.mxu0 0.0
      %2243 = vmatpush1.msra.mxu0 0.0
      %2244 = vmatprep.subr.mxu0 0.0
      %2245 = vmatpush1.msra.mxu0 0.0
      %2246 = vmatprep.subr.mxu0 0.0
      %2247 = vmatpush1.msra.mxu0 0.0
      %2248 = vmatprep.subr.mxu0 0.0
      %2249 = vmatpush1.msra.mxu0 0.0
      %2250 = vmatprep.subr.mxu0 0.0
      %2251 = vmatpush1.msra.mxu0 0.0
      %2252 = vmatprep.subr.mxu0 0.0
      %2253 = vmatpush1.msra.mxu0 0.0
      %2254 = vmatprep.subr.mxu0 0.0
      %2255 = vmatpush1.msra.mxu0 0.0
      %2256 = vmatprep.subr.mxu0 0.0
      %2257 = vmatpush1.msra.mxu0 0.0
      %2258 = vmatprep.subr.mxu0 0.0
      %2259 = vmatpush1.msra.mxu0 0.0
      %2260 = vmatprep.mubr.f32.mxu0 0.0
      %2261 = vmatmul.mubr.f32.gmra.mrb[0].mxu0 %v2188
      %v2262 = vpop.f32.mrb[0].mxu0
      %v2263 = vadd.f32 %v2177, %v2262
      %v2264 = vpop.f32.mrb[0].mxu0
      %2265 = vmatprep.mubr.f32.mxu0 0.0
      %2266 = vmatmul.mubr.f32.gmra.mrb[0].mxu0 %v2191
      %v2267 = vpop.f32.mrb[0].mxu0
      %v2268 = vpop.f32.mrb[0].mxu0
      %2269 = vmatprep.mubr.f32.mxu0 0.0
      %2270 = vmatmul.mubr.f32.gmra.mrb[0].mxu0 %v2194
      %v2271 = vpop.f32.mrb[0].mxu0
      %v2272 = vpop.f32.mrb[0].mxu0
      %2273 = vdwg.mxu0
      %2274 = vst [vmem:[%s192] sm:$0xff] %v2263
      %p2275 = scmp.lt.s32.totalorder %s15, 1
      %s2276 = scalar_select %p2275, %s15, 1
      %s2277 = smul.addr %s2276, 8
      %s2278 = scalar_lea.vmem %s4, %s2277
      // Predicated region
      $region37: #{wan_pde_solver_forward.1} parent=35 // pred_check
        %p2279 = pneg %p122
      $region38: #{wan_pde_solver_forward.1} parent=35 // pred_check_branch
        %2281 = sbr.rel (%p2279) target = $region40
      $region39: #{wan_pde_solver_forward.1} parent=35 // pred_region
        _
      $region40: #{wan_pde_solver_forward.1} parent=35 // pred_fallthru
        _
    $region36: #{wan_pde_solver_forward.1} parent=5 // pred_fallthru
      _
    %p2282 = scmp.le.s32.totalorder 2, %s10
    // Predicated region
    $region41: #{wan_pde_solver_forward.1} parent=5 // pred_check
      %p2283 = pneg %p2282
    $region42: #{wan_pde_solver_forward.1} parent=5 // pred_check_branch
      %2285 = sbr.rel (%p2283) target = $region44
    $region43: #{wan_pde_solver_forward.1} parent=5 // pred_region
      %s2286 = ssub.s32 %s10, 2
      // Predicated region
      $region45: #{wan_pde_solver_forward.1} parent=43 // pred_check
        %p2287 = pneg %p128
      $region46: #{wan_pde_solver_forward.1} parent=43 // pred_check_branch
        %2289 = sbr.rel (%p2287) target = $region48
      $region47: #{wan_pde_solver_forward.1} parent=43 // pred_region
        %p2290 = scmp.lt.s32.totalorder %s16, 1
        %s2291 = scalar_select %p2290, %s16, 1
        %s2292 = smul.addr %s2291, 8
        %s2293 = scalar_lea.vmem %s4, %s2292
      $region48: #{wan_pde_solver_forward.1} parent=43 // pred_fallthru
        _
    $region44: #{wan_pde_solver_forward.1} parent=5 // pred_fallthru
      _
  $region6: #{wan_pde_solver_forward.1} parent=0 // loop_footer
    %s14 = sadd.s32 1, %s10
  $region7: #{wan_pde_solver_forward.1} parent=0 // loop_footer_branch
    %9 = sbr.rel target = $region3
  $region8: #{wan_pde_solver_forward.1} parent=0 // loop_exit
    _

</llo_original>
